<compile_context>
chip_gen: v7x
topology: tpu7x:2x2x1
jax: 0.10.0
libtpu: 0.0.40
codegen_flags: <defaults>
</compile_context>

<pallas_src>
import numpy as np

import jax
import jax.numpy as jnp
from jax.experimental import pallas as pl
from jax.experimental.pallas import tpu as pltpu


# ---------------------------------------------------------------------------
# Kernel
# ---------------------------------------------------------------------------
def _basic_block_kernel(x_ref, w1_ref, w2_ref, sb_ref, mtop_ref, mbot_ref,
                        out_ref, pad_ref):
    """One grid step processes B images stacked along the row axis.

    x_ref    : [M, WC]    f32   M = B*H rows of B images (lane packs (w, c))
    w1_ref   : [3*WC, WC] bf16  conv1 banded weight (dy-major sub-bands)
    w2_ref   : [3*WC, WC] bf16  conv2 banded weight
    sb_ref   : [8, WC]    f32   rows 0..3 = BN1 scale, BN1 bias, BN2 scale, BN2 bias
    mtop_ref : [M, 1]     f32   0.0 on the first row of each image, else 1.0
    mbot_ref : [M, 1]     f32   0.0 on the last  row of each image, else 1.0
    out_ref  : [M, WC]    f32
    pad_ref  : [M+2, WC]  f32   scratch; rows 0 and M+1 are the zero halo
    """
    M, WC = x_ref.shape

    # Zero only the two halo rows, every grid step (each core owns its scratch).
    zrow = jnp.zeros((1, WC), jnp.float32)
    pad_ref[0:1, :] = zrow
    pad_ref[M + 1:M + 2, :] = zrow

    x = x_ref[...]
    mtop = mtop_ref[...]
    mbot = mbot_ref[...]

    def conv_bn(src, w_ref, scale, bias):
        # Row-padded copy of the activations; the shifted views below supply the
        # h-1 / h+1 rows.  The 0/1 row masks zero the rows that would otherwise
        # leak across image boundaries inside the batched block.
        pad_ref[1:M + 1, :] = src
        up = (pad_ref[0:M, :] * mtop).astype(jnp.bfloat16)         # x[h-1]
        mid = src.astype(jnp.bfloat16)                             # x[h]
        down = (pad_ref[2:M + 2, :] * mbot).astype(jnp.bfloat16)   # x[h+1]
        # Three accumulating MXU dots (K = WC each) against the dy sub-bands.
        # The dx offsets (and their W zero-padding) live inside each band.
        acc = jnp.dot(up, w_ref[0:WC, :],
                      preferred_element_type=jnp.float32)
        acc += jnp.dot(mid, w_ref[WC:2 * WC, :],
                       preferred_element_type=jnp.float32)
        acc += jnp.dot(down, w_ref[2 * WC:3 * WC, :],
                       preferred_element_type=jnp.float32)
        return acc * scale + bias          # folded BN (+conv bias) epilogue, f32

    s1 = sb_ref[0:1, :]
    b1 = sb_ref[1:2, :]
    s2 = sb_ref[2:3, :]
    b2 = sb_ref[3:4, :]

    h1 = jnp.maximum(conv_bn(x, w1_ref, s1, b1), 0.0)   # conv1 + BN1 + ReLU
    h2 = conv_bn(h1, w2_ref, s2, b2)                    # conv2 + BN2
    out_ref[...] = jnp.maximum(h2 + x, 0.0).astype(out_ref.dtype)  # +res, ReLU


# ---------------------------------------------------------------------------
# One-time host-side preparation (outside the per-call jit)
# ---------------------------------------------------------------------------
def _banded_weight_np(w_hwio, W):
    """[3, 3, Cin, Cout] HWIO -> [3*W*Cin, W*Cout] banded matrix (numpy).

    Row index = dy*(W*Cin) + w_in*Cin + ci, col index = w_out*Cout + co,
    entry = w[dy, w_in - w_out + 1, ci, co] when 0 <= w_in - w_out + 1 < 3, else 0.
    The dx offset (and its W zero-padding) is absorbed into the band.
    """
    w = np.asarray(w_hwio, np.float32)
    kh, kw, cin, cout = w.shape
    assert kh == 3 and kw == 3, "banded formulation assumes a 3x3 kernel"
    wi = np.arange(W)
    dx = wi[:, None] - wi[None, :] + kw // 2                 # [w_in, w_out] -> tap
    valid = ((dx >= 0) & (dx < kw)).astype(np.float32)
    dxc = np.clip(dx, 0, kw - 1)
    big = w[:, dxc, :, :]                                    # [kh, Win, Wout, Cin, Cout]
    big = big * valid[None, :, :, None, None]
    big = np.transpose(big, (0, 1, 3, 2, 4))                 # [kh, Win, Cin, Wout, Cout]
    return big.reshape(kh * W * cin, W * cout)


def _fold_bn_np(conv_bias, gamma, beta, mean, var, eps=1e-5):
    scale = np.asarray(gamma, np.float32) / np.sqrt(np.asarray(var, np.float32) + eps)
    bias = scale * (np.asarray(conv_bias, np.float32) - np.asarray(mean, np.float32)) \
        + np.asarray(beta, np.float32)
    return scale.astype(np.float32), bias.astype(np.float32)


def prepare_basic_block(params, W):
    """Build banded bf16 weights and packed folded-BN scale/bias once."""
    kh, kw, cin, cout = params["w1"].shape
    assert cin == cout, "no downsample path: inplanes must equal planes"
    WC = W * cin

    s1, b1 = _fold_bn_np(params["b1"], params["gamma1"], params["beta1"],
                         params["mean1"], params["var1"])
    s2, b2 = _fold_bn_np(params["b2"], params["gamma2"], params["beta2"],
                         params["mean2"], params["var2"])

    sb = np.zeros((8, WC), np.float32)      # 4 live rows padded to an (8, 128) tile
    sb[0] = np.tile(s1, W)
    sb[1] = np.tile(b1, W)
    sb[2] = np.tile(s2, W)
    sb[3] = np.tile(b2, W)

    w1b = jnp.asarray(_banded_weight_np(params["w1"], W), jnp.bfloat16)
    w2b = jnp.asarray(_banded_weight_np(params["w2"], W), jnp.bfloat16)
    return {"w1b": w1b, "w2b": w2b, "sb": jnp.asarray(sb)}


# ---------------------------------------------------------------------------
# Forward wrapper
# ---------------------------------------------------------------------------
def _pick_images_per_step(N, H, target_rows=256):
    """Largest divisor B of N with B*H <= target_rows (256 fills the v6e/v7x
    MXU row dimension; two full 128-row passes on v5e)."""
    best = 1
    for b in range(1, N + 1):
        if N % b == 0 and b * H <= target_rows:
            best = b
    return best


@jax.jit
def basic_block_pallas(x_nchw, prepared):
    """x: [N, C, H, W] float32 -> [N, C, H, W] float32 (eval-mode BN)."""
    N, C, H, W = x_nchw.shape
    WC = W * C
    assert prepared["w1b"].shape == (3 * WC, WC)

    B = _pick_images_per_step(N, H)
    M = B * H
    n_steps = N // B

    # VMEM budget guard (v7x: 64 MiB physical / 32 MiB default scoped VMEM).
    vmem_bytes = (
        2 * (M * WC * 4) * 2           # x + out blocks, double-buffered, f32
        + 2 * (3 * WC * WC * 2) * 2    # two bf16 banded weights, double-buffered
        + (M + 8) * WC * 4             # row-padded scratch
        + 2 * (M * 128 * 4) * 2        # (M, 1) row masks, lane-padded tiles
        + 8 * WC * 4 * 2)              # packed scale/bias
    if vmem_bytes > 32 * 1024 * 1024:
        raise NotImplementedError(
            f"VMEM estimate {vmem_bytes / 2**20:.1f} MiB exceeds the 32 MiB scoped "
            "limit: tile the fused (w,c) lane axis, lower B, or raise vmem_limit_bytes.")

    # Per-image row masks (trace-time numpy -> baked constants, zero runtime cost).
    h_idx = np.arange(M) % H
    mtop = jnp.asarray((h_idx != 0).astype(np.float32).reshape(M, 1))
    mbot = jnp.asarray((h_idx != H - 1).astype(np.float32).reshape(M, 1))

    # NCHW -> lane-fused [(n, h), (w, c)] layout.
    # TODO(synk): accept NHWC at the module boundary to drop these two HBM passes.
    x2d = jnp.transpose(x_nchw, (0, 2, 3, 1)).reshape(N * H, WC)

    img_spec = pl.BlockSpec((M, WC), lambda n: (n, 0))
    const = lambda shape: pl.BlockSpec(shape, lambda n: (0, 0))

    out2d = pl.pallas_call(
        _basic_block_kernel,
        out_shape=jax.ShapeDtypeStruct((N * H, WC), jnp.float32),
        grid_spec=pltpu.PrefetchScalarGridSpec(
            num_scalar_prefetch=0,
            grid=(n_steps,),
            in_specs=[
                img_spec,                  # x (also serves as the residual)
                const((3 * WC, WC)),       # w1 banded (bf16)
                const((3 * WC, WC)),       # w2 banded (bf16)
                const((8, WC)),            # packed BN scale/bias
                const((M, 1)),             # top-row mask
                const((M, 1)),             # bottom-row mask
            ],
            out_specs=img_spec,
            scratch_shapes=[pltpu.VMEM((M + 2, WC), jnp.float32)],
        ),
        compiler_params=pltpu.CompilerParams(
            dimension_semantics=("parallel",)),   # 2 TCs on v7x; no-op on v5e/v6e
    )(x2d, prepared["w1b"], prepared["w2b"], prepared["sb"], mtop, mbot)

    return jnp.transpose(out2d.reshape(N, H, W, C), (0, 3, 1, 2))


# ---------------------------------------------------------------------------
# Synthetic parameters + pure-JAX reference
# ---------------------------------------------------------------------------
def make_params(key, inplanes, planes):
    """Synthetic conv weights/biases + distinct eval-mode BN1/BN2 parameters."""
    ks = jax.random.split(key, 12)
    return {
        "w1": 0.1 * jax.random.normal(ks[0], (3, 3, inplanes, planes), jnp.float32),
        "b1": 0.1 * jax.random.normal(ks[1], (planes,), jnp.float32),
        "w2": 0.1 * jax.random.normal(ks[2], (3, 3, planes, planes), jnp.float32),
        "b2": 0.1 * jax.random.normal(ks[3], (planes,), jnp.float32),
        "gamma1": 1.0 + 0.1 * jax.random.normal(ks[4], (planes,), jnp.float32),
        "beta1": 0.1 * jax.random.normal(ks[5], (planes,), jnp.float32),
        "mean1": 0.1 * jax.random.normal(ks[6], (planes,), jnp.float32),
        "var1": 1.0 + 0.5 * jax.random.uniform(ks[7], (planes,), jnp.float32),
        "gamma2": 1.0 + 0.1 * jax.random.normal(ks[8], (planes,), jnp.float32),
        "beta2": 0.1 * jax.random.normal(ks[9], (planes,), jnp.float32),
        "mean2": 0.1 * jax.random.normal(ks[10], (planes,), jnp.float32),
        "var2": 1.0 + 0.5 * jax.random.uniform(ks[11], (planes,), jnp.float32),
    }


def basic_block_ref(x_nchw, p, eps=1e-5):
    """Pure-JAX reference (eval-mode BN) for correctness checking."""
    x = jnp.transpose(x_nchw, (0, 2, 3, 1))
    dn = ("NHWC", "HWIO", "NHWC")

    def conv(x, w, b):
        return jax.lax.conv_general_dilated(
            x, w, (1, 1), ((1, 1), (1, 1)), dimension_numbers=dn) + b

    def bn(x, g, bt, m, v):
        return g * (x - m) / jnp.sqrt(v + eps) + bt

    out = jax.nn.relu(bn(conv(x, p["w1"], p["b1"]),
                         p["gamma1"], p["beta1"], p["mean1"], p["var1"]))
    out = bn(conv(out, p["w2"], p["b2"]),
             p["gamma2"], p["beta2"], p["mean2"], p["var2"])
    out = jax.nn.relu(out + x)
    return jnp.transpose(out, (0, 3, 1, 2))


if __name__ == "__main__":
    key = jax.random.PRNGKey(0)
    kx, kp = jax.random.split(key)

    # inplanes == planes == 8, stride=1, dilation=1, no downsample.
    # W*C = 16*8 = 128 -> fused (w, c) lane axis is exactly lane-dense.
    # N=32 -> B=16 images per grid step, M=256 rows per MXU dot, grid=(2,).
    N, C, H, W = 32, 8, 16, 16
    x = jax.random.normal(kx, (N, C, H, W), jnp.float32)
    params = make_params(kp, C, C)

    prepared = prepare_basic_block(params, W)      # one-time host-side prep
    out = jax.block_until_ready(basic_block_pallas(x, prepared))
    ref = basic_block_ref(x, params)

    assert out.shape == (N, C, H, W)
    err = float(jnp.max(jnp.abs(out - ref)))
    # bf16 MXU operands -> tolerance relaxed vs. the all-f32 version.
    assert jnp.allclose(out, ref, rtol=5e-2, atol=5e-2), f"max abs err = {err}"

    print("KERNEL_OK")
</pallas_src>

<mosaic_0001>
module attributes {stable_mosaic.version = 11 : i64} {
  func.func @_basic_block_kernel(%arg0: i32, %arg1: memref<256x128xf32, #tpu.memory_space<vmem>>, %arg2: memref<384x128xbf16, #tpu.memory_space<vmem>>, %arg3: memref<384x128xbf16, #tpu.memory_space<vmem>>, %arg4: memref<8x128xf32, #tpu.memory_space<vmem>>, %arg5: memref<256x1xf32, #tpu.memory_space<vmem>>, %arg6: memref<256x1xf32, #tpu.memory_space<vmem>>, %arg7: memref<256x128xf32, #tpu.memory_space<vmem>>, %arg8: memref<258x128xf32, #tpu.memory_space<vmem>>) attributes {dimension_semantics = [#tpu.dimension_semantics<parallel>], iteration_bounds = array<i64: 2>, scalar_prefetch = 0 : i64, scratch_operands = 1 : i64, tpu.core_type = #tpu.core_type<tc>, window_params = [{transform_indices = @transform_0, window_bounds = array<i64: 256, 128>}, {pipeline_mode = #tpu.pipeline_mode<synchronous>, transform_indices = @transform_1, window_bounds = array<i64: 384, 128>}, {pipeline_mode = #tpu.pipeline_mode<synchronous>, transform_indices = @transform_2, window_bounds = array<i64: 384, 128>}, {pipeline_mode = #tpu.pipeline_mode<synchronous>, transform_indices = @transform_3, window_bounds = array<i64: 8, 128>}, {pipeline_mode = #tpu.pipeline_mode<synchronous>, transform_indices = @transform_4, window_bounds = array<i64: 256, 1>}, {pipeline_mode = #tpu.pipeline_mode<synchronous>, transform_indices = @transform_5, window_bounds = array<i64: 256, 1>}, {transform_indices = @transform_6, window_bounds = array<i64: 256, 128>}]} {
    %cst = arith.constant 0.000000e+00 : f32
    %0 = vector.broadcast %cst : f32 to vector<1x128xf32>
    %c0 = arith.constant 0 : index
    %c0_0 = arith.constant 0 : index
    %1 = vector.load %arg8[%c0, %c0_0] : memref<258x128xf32, #tpu.memory_space<vmem>>, vector<1x128xf32>
    tpu.vector_store %arg8[%c0, %c0_0], %0 {strides = array<i32>} : memref<258x128xf32, #tpu.memory_space<vmem>>, vector<1x128xf32>,
    %c257 = arith.constant 257 : index
    %c0_1 = arith.constant 0 : index
    %2 = vector.load %arg8[%c257, %c0_1] : memref<258x128xf32, #tpu.memory_space<vmem>>, vector<1x128xf32>
    tpu.vector_store %arg8[%c257, %c0_1], %0 {strides = array<i32>} : memref<258x128xf32, #tpu.memory_space<vmem>>, vector<1x128xf32>,
    %c0_2 = arith.constant 0 : index
    %c0_3 = arith.constant 0 : index
    %3 = vector.load %arg1[%c0_2, %c0_3] : memref<256x128xf32, #tpu.memory_space<vmem>>, vector<256x128xf32>
    %c0_4 = arith.constant 0 : index
    %c0_5 = arith.constant 0 : index
    %4 = vector.load %arg5[%c0_4, %c0_5] : memref<256x1xf32, #tpu.memory_space<vmem>>, vector<256x1xf32>
    %c0_6 = arith.constant 0 : index
    %c0_7 = arith.constant 0 : index
    %5 = vector.load %arg6[%c0_6, %c0_7] : memref<256x1xf32, #tpu.memory_space<vmem>>, vector<256x1xf32>
    %c0_8 = arith.constant 0 : index
    %c0_9 = arith.constant 0 : index
    %6 = vector.load %arg4[%c0_8, %c0_9] : memref<8x128xf32, #tpu.memory_space<vmem>>, vector<1x128xf32>
    %c1 = arith.constant 1 : index
    %c0_10 = arith.constant 0 : index
    %7 = vector.load %arg4[%c1, %c0_10] : memref<8x128xf32, #tpu.memory_space<vmem>>, vector<1x128xf32>
    %c2 = arith.constant 2 : index
    %c0_11 = arith.constant 0 : index
    %8 = vector.load %arg4[%c2, %c0_11] : memref<8x128xf32, #tpu.memory_space<vmem>>, vector<1x128xf32>
    %c3 = arith.constant 3 : index
    %c0_12 = arith.constant 0 : index
    %9 = vector.load %arg4[%c3, %c0_12] : memref<8x128xf32, #tpu.memory_space<vmem>>, vector<1x128xf32>
    %c1_13 = arith.constant 1 : index
    %c0_14 = arith.constant 0 : index
    %10 = vector.load %arg8[%c1_13, %c0_14] : memref<258x128xf32, #tpu.memory_space<vmem>>, vector<256x128xf32>
    tpu.vector_store %arg8[%c1_13, %c0_14], %3 {strides = array<i32>} : memref<258x128xf32, #tpu.memory_space<vmem>>, vector<256x128xf32>,
    %c0_15 = arith.constant 0 : index
    %c0_16 = arith.constant 0 : index
    %11 = vector.load %arg8[%c0_15, %c0_16] : memref<258x128xf32, #tpu.memory_space<vmem>>, vector<256x128xf32>
    %12 = vector.broadcast %4 : vector<256x1xf32> to vector<256x128xf32>
    %13 = arith.mulf %11, %12 : vector<256x128xf32>
    %14 = arith.truncf %13 : vector<256x128xf32> to vector<256x128xbf16>
    %15 = arith.truncf %3 : vector<256x128xf32> to vector<256x128xbf16>
    %c2_17 = arith.constant 2 : index
    %c0_18 = arith.constant 0 : index
    %16 = vector.load %arg8[%c2_17, %c0_18] : memref<258x128xf32, #tpu.memory_space<vmem>>, vector<256x128xf32>
    %17 = vector.broadcast %5 : vector<256x1xf32> to vector<256x128xf32>
    %18 = arith.mulf %16, %17 : vector<256x128xf32>
    %19 = arith.truncf %18 : vector<256x128xf32> to vector<256x128xbf16>
    %c0_19 = arith.constant 0 : index
    %c0_20 = arith.constant 0 : index
    %20 = vector.load %arg2[%c0_19, %c0_20] : memref<384x128xbf16, #tpu.memory_space<vmem>>, vector<128x128xbf16>
    %cst_21 = arith.constant dense<0.000000e+00> : vector<256x128xf32>
    %21 = tpu.matmul %14, %20, %cst_21 {dimension_numbers = #tpu.dot_dimension_numbers<[1], [0], [0], [1], [0, 0, 1, 1], [], []>} : vector<256x128xbf16>, vector<128x128xbf16>, vector<256x128xf32> -> vector<256x128xf32>
    %c128 = arith.constant 128 : index
    %c0_22 = arith.constant 0 : index
    %22 = vector.load %arg2[%c128, %c0_22] : memref<384x128xbf16, #tpu.memory_space<vmem>>, vector<128x128xbf16>
    %cst_23 = arith.constant dense<0.000000e+00> : vector<256x128xf32>
    %23 = tpu.matmul %15, %22, %cst_23 {dimension_numbers = #tpu.dot_dimension_numbers<[1], [0], [0], [1], [0, 0, 1, 1], [], []>} : vector<256x128xbf16>, vector<128x128xbf16>, vector<256x128xf32> -> vector<256x128xf32>
    %24 = arith.addf %21, %23 : vector<256x128xf32>
    %c256 = arith.constant 256 : index
    %c0_24 = arith.constant 0 : index
    %25 = vector.load %arg2[%c256, %c0_24] : memref<384x128xbf16, #tpu.memory_space<vmem>>, vector<128x128xbf16>
    %cst_25 = arith.constant dense<0.000000e+00> : vector<256x128xf32>
    %26 = tpu.matmul %19, %25, %cst_25 {dimension_numbers = #tpu.dot_dimension_numbers<[1], [0], [0], [1], [0, 0, 1, 1], [], []>} : vector<256x128xbf16>, vector<128x128xbf16>, vector<256x128xf32> -> vector<256x128xf32>
    %27 = arith.addf %24, %26 : vector<256x128xf32>
    %28 = vector.broadcast %6 : vector<1x128xf32> to vector<256x128xf32>
    %29 = arith.mulf %27, %28 : vector<256x128xf32>
    %30 = vector.broadcast %7 : vector<1x128xf32> to vector<256x128xf32>
    %31 = arith.addf %29, %30 : vector<256x128xf32>
    %cst_26 = arith.constant 0.000000e+00 : f32
    %32 = vector.broadcast %cst_26 : f32 to vector<256x128xf32>
    %33 = arith.maximumf %31, %32 : vector<256x128xf32>
    %c1_27 = arith.constant 1 : index
    %c0_28 = arith.constant 0 : index
    %34 = vector.load %arg8[%c1_27, %c0_28] : memref<258x128xf32, #tpu.memory_space<vmem>>, vector<256x128xf32>
    tpu.vector_store %arg8[%c1_27, %c0_28], %33 {strides = array<i32>} : memref<258x128xf32, #tpu.memory_space<vmem>>, vector<256x128xf32>,
    %c0_29 = arith.constant 0 : index
    %c0_30 = arith.constant 0 : index
    %35 = vector.load %arg8[%c0_29, %c0_30] : memref<258x128xf32, #tpu.memory_space<vmem>>, vector<256x128xf32>
    %36 = vector.broadcast %4 : vector<256x1xf32> to vector<256x128xf32>
    %37 = arith.mulf %35, %36 : vector<256x128xf32>
    %38 = arith.truncf %37 : vector<256x128xf32> to vector<256x128xbf16>
    %39 = arith.truncf %33 : vector<256x128xf32> to vector<256x128xbf16>
    %c2_31 = arith.constant 2 : index
    %c0_32 = arith.constant 0 : index
    %40 = vector.load %arg8[%c2_31, %c0_32] : memref<258x128xf32, #tpu.memory_space<vmem>>, vector<256x128xf32>
    %41 = vector.broadcast %5 : vector<256x1xf32> to vector<256x128xf32>
    %42 = arith.mulf %40, %41 : vector<256x128xf32>
    %43 = arith.truncf %42 : vector<256x128xf32> to vector<256x128xbf16>
    %c0_33 = arith.constant 0 : index
    %c0_34 = arith.constant 0 : index
    %44 = vector.load %arg3[%c0_33, %c0_34] : memref<384x128xbf16, #tpu.memory_space<vmem>>, vector<128x128xbf16>
    %cst_35 = arith.constant dense<0.000000e+00> : vector<256x128xf32>
    %45 = tpu.matmul %38, %44, %cst_35 {dimension_numbers = #tpu.dot_dimension_numbers<[1], [0], [0], [1], [0, 0, 1, 1], [], []>} : vector<256x128xbf16>, vector<128x128xbf16>, vector<256x128xf32> -> vector<256x128xf32>
    %c128_36 = arith.constant 128 : index
    %c0_37 = arith.constant 0 : index
    %46 = vector.load %arg3[%c128_36, %c0_37] : memref<384x128xbf16, #tpu.memory_space<vmem>>, vector<128x128xbf16>
    %cst_38 = arith.constant dense<0.000000e+00> : vector<256x128xf32>
    %47 = tpu.matmul %39, %46, %cst_38 {dimension_numbers = #tpu.dot_dimension_numbers<[1], [0], [0], [1], [0, 0, 1, 1], [], []>} : vector<256x128xbf16>, vector<128x128xbf16>, vector<256x128xf32> -> vector<256x128xf32>
    %48 = arith.addf %45, %47 : vector<256x128xf32>
    %c256_39 = arith.constant 256 : index
    %c0_40 = arith.constant 0 : index
    %49 = vector.load %arg3[%c256_39, %c0_40] : memref<384x128xbf16, #tpu.memory_space<vmem>>, vector<128x128xbf16>
    %cst_41 = arith.constant dense<0.000000e+00> : vector<256x128xf32>
    %50 = tpu.matmul %43, %49, %cst_41 {dimension_numbers = #tpu.dot_dimension_numbers<[1], [0], [0], [1], [0, 0, 1, 1], [], []>} : vector<256x128xbf16>, vector<128x128xbf16>, vector<256x128xf32> -> vector<256x128xf32>
    %51 = arith.addf %48, %50 : vector<256x128xf32>
    %52 = vector.broadcast %8 : vector<1x128xf32> to vector<256x128xf32>
    %53 = arith.mulf %51, %52 : vector<256x128xf32>
    %54 = vector.broadcast %9 : vector<1x128xf32> to vector<256x128xf32>
    %55 = arith.addf %53, %54 : vector<256x128xf32>
    %56 = arith.addf %55, %3 : vector<256x128xf32>
    %cst_42 = arith.constant 0.000000e+00 : f32
    %57 = vector.broadcast %cst_42 : f32 to vector<256x128xf32>
    %58 = arith.maximumf %56, %57 : vector<256x128xf32>
    %c0_43 = arith.constant 0 : index
    %c0_44 = arith.constant 0 : index
    %59 = vector.load %arg7[%c0_43, %c0_44] : memref<256x128xf32, #tpu.memory_space<vmem>>, vector<256x128xf32>
    tpu.vector_store %arg7[%c0_43, %c0_44], %58 {strides = array<i32>} : memref<256x128xf32, #tpu.memory_space<vmem>>, vector<256x128xf32>,
    return
  }
  func.func @transform_0(%arg0: i32) -> (i32, i32) {
    %c0_i32 = arith.constant 0 : i32
    %c0_i32_0 = arith.constant 0 : i32
    return %arg0, %c0_i32 : i32, i32
  }
  func.func @transform_1(%arg0: i32) -> (i32, i32) {
    %c0_i32 = arith.constant 0 : i32
    %c0_i32_0 = arith.constant 0 : i32
    %c0_i32_1 = arith.constant 0 : i32
    return %c0_i32, %c0_i32_0 : i32, i32
  }
  func.func @transform_2(%arg0: i32) -> (i32, i32) {
    %c0_i32 = arith.constant 0 : i32
    %c0_i32_0 = arith.constant 0 : i32
    %c0_i32_1 = arith.constant 0 : i32
    return %c0_i32, %c0_i32_0 : i32, i32
  }
  func.func @transform_3(%arg0: i32) -> (i32, i32) {
    %c0_i32 = arith.constant 0 : i32
    %c0_i32_0 = arith.constant 0 : i32
    %c0_i32_1 = arith.constant 0 : i32
    return %c0_i32, %c0_i32_0 : i32, i32
  }
  func.func @transform_4(%arg0: i32) -> (i32, i32) {
    %c0_i32 = arith.constant 0 : i32
    %c0_i32_0 = arith.constant 0 : i32
    %c0_i32_1 = arith.constant 0 : i32
    return %c0_i32, %c0_i32_0 : i32, i32
  }
  func.func @transform_5(%arg0: i32) -> (i32, i32) {
    %c0_i32 = arith.constant 0 : i32
    %c0_i32_0 = arith.constant 0 : i32
    %c0_i32_1 = arith.constant 0 : i32
    return %c0_i32, %c0_i32_0 : i32, i32
  }
  func.func @transform_6(%arg0: i32) -> (i32, i32) {
    %c0_i32 = arith.constant 0 : i32
    %c0_i32_0 = arith.constant 0 : i32
    return %arg0, %c0_i32 : i32, i32
  }
}

</mosaic_0001>

<llo_original>
// kernel: basic_block_pallas.1
$region0: #{basic_block_pallas.1}
  #allocation0 [shape = 'u32[]', space=smem, size = 0x4, offset = 0x4, fixed_abs, tag = 'smem constant byte address 0x4 - core index']
  #allocation1 [shape = 'u32[144,128]{1,0:T(1,128)}', space=vmem, size = 0x12000, scoped, tag = 'internal scratch']
  #allocation2 [shape = 'f32[258,128]{1,0:T(8,128)}', space=vmem, size = 0x21000, scoped, tag = 'scratch operand']
  %s0 = inlined_call_operand.vmem [shape: f32[512,128], index: 0, kind: input, shape index: {}]
  %s1 = inlined_call_operand.vmem [shape: bf16[384,128], index: 1, kind: input, shape index: {}]
  %s2 = inlined_call_operand.vmem [shape: bf16[384,128], index: 2, kind: input, shape index: {}]
  %s3 = inlined_call_operand.vmem [shape: f32[8,128], index: 3, kind: input, shape index: {}]
  %s4 = inlined_call_operand.vmem [shape: f32[256,1], index: 4, kind: input, shape index: {}]
  %s5 = inlined_call_operand.vmem [shape: f32[256,1], index: 5, kind: input, shape index: {}]
  %s6 = inlined_call_operand.vmem [shape: f32[512,128], index: 6, kind: output, shape index: {}]
  %s7 = sld [smem:[#allocation0]]
  $region57: #{basic_block_pallas.1} parent=0
    _
  %s9 = ssub.s32 1, %s7
  %s10 = scalar_select 0, %s9, %s7
  loop: start=0, step=1, limit=4
  $region2: #{basic_block_pallas.1} parent=0 // loop_pre_header
    _
  $region3: #{basic_block_pallas.1} parent=0 // loop_header
    %s12 = sphi 0, %s16
    %p13 = scmp.ge.s32.totalorder %s12, 4
    %s22 = sphi 0, %s24
    %s25 = sphi 0, %s22
    %s26 = sphi 0, %s25
    %s42 = sphi 0, %s26
    %s46 = sphi 0, %s46
    %s48 = sphi 0, %s46
    %s49 = sphi 0, %s48
    %s63 = sphi 0, %s49
    %s67 = sphi 0, %s67
    %s69 = sphi 0, %s67
    %s70 = sphi 0, %s69
    %s84 = sphi 0, %s70
    %s88 = sphi 0, %s88
    %s90 = sphi 0, %s88
    %s91 = sphi 0, %s90
    %s105 = sphi 0, %s91
    %s109 = sphi 0, %s109
    %s111 = sphi 0, %s109
    %s112 = sphi 0, %s111
    %s126 = sphi 0, %s112
    %s130 = sphi 0, %s130
    %s132 = sphi 0, %s130
    %s133 = sphi 0, %s132
    %s147 = sphi 0, %s133
    %s153 = sphi 0, %s155
    %s156 = sphi 0, %s153
    %s157 = sphi 0, %s156
    %s173 = sphi 0, %s157
  $region4: #{basic_block_pallas.1} parent=0 // loop_header_branch
    %15 = sbr.rel (%p13) target = $region8
  $region5: #{basic_block_pallas.1} parent=0 // loop_body
    %s17 = ssub.s32 %s12, 1
    %s18 = ssub.s32 %s12, 2
    %s19 = sadd.s32 %s12, 1
    %s20 = ssub.s32 %s12, %s19
    %p21 = scmp.eq.s32.totalorder %s20, 0
    %s23 = sadd.s32 %s22, 1
    %s24 = scalar_select %p21, %s22, %s23
    %p27 = pneg %p21
    %p28 = scmp.eq.s32.totalorder %s12, 1
    %p29 = por %p27, %p28
    %p30 = scmp.ne.s32.totalorder %s22, %s25
    %p31 = scmp.eq.s32.totalorder %s12, 0
    %p32 = por %p30, %p31
    %p33 = scmp.ne.s32.totalorder %s22, %s25
    %p34 = scmp.eq.s32.totalorder %s17, 1
    %p35 = por %p33, %p34
    %p36 = scmp.ne.s32.totalorder %s25, %s26
    %p37 = scmp.eq.s32.totalorder %s17, 0
    %p38 = por %p36, %p37
    %p39 = scmp.ne.s32.totalorder %s25, %s26
    %p40 = scmp.eq.s32.totalorder %s18, 1
    %p41 = por %p39, %p40
    %p43 = scmp.ne.s32.totalorder %s26, %s42
    %p44 = scmp.eq.s32.totalorder %s18, 0
    %p45 = por %p43, %p44
    %s47 = sadd.s32 %s46, 1
    %p50 = scmp.eq.s32.totalorder %s12, 1
    %p51 = scmp.ne.s32.totalorder %s46, %s48
    %p52 = scmp.eq.s32.totalorder %s12, 0
    %p53 = por %p51, %p52
    %p54 = scmp.ne.s32.totalorder %s46, %s48
    %p55 = scmp.eq.s32.totalorder %s17, 1
    %p56 = por %p54, %p55
    %p57 = scmp.ne.s32.totalorder %s48, %s49
    %p58 = scmp.eq.s32.totalorder %s17, 0
    %p59 = por %p57, %p58
    %p60 = scmp.ne.s32.totalorder %s48, %s49
    %p61 = scmp.eq.s32.totalorder %s18, 1
    %p62 = por %p60, %p61
    %p64 = scmp.ne.s32.totalorder %s49, %s63
    %p65 = scmp.eq.s32.totalorder %s18, 0
    %p66 = por %p64, %p65
    %s68 = sadd.s32 %s67, 1
    %p71 = scmp.eq.s32.totalorder %s12, 1
    %p72 = scmp.ne.s32.totalorder %s67, %s69
    %p73 = scmp.eq.s32.totalorder %s12, 0
    %p74 = por %p72, %p73
    %p75 = scmp.ne.s32.totalorder %s67, %s69
    %p76 = scmp.eq.s32.totalorder %s17, 1
    %p77 = por %p75, %p76
    %p78 = scmp.ne.s32.totalorder %s69, %s70
    %p79 = scmp.eq.s32.totalorder %s17, 0
    %p80 = por %p78, %p79
    %p81 = scmp.ne.s32.totalorder %s69, %s70
    %p82 = scmp.eq.s32.totalorder %s18, 1
    %p83 = por %p81, %p82
    %p85 = scmp.ne.s32.totalorder %s70, %s84
    %p86 = scmp.eq.s32.totalorder %s18, 0
    %p87 = por %p85, %p86
    %s89 = sadd.s32 %s88, 1
    %p92 = scmp.eq.s32.totalorder %s12, 1
    %p93 = scmp.ne.s32.totalorder %s88, %s90
    %p94 = scmp.eq.s32.totalorder %s12, 0
    %p95 = por %p93, %p94
    %p96 = scmp.ne.s32.totalorder %s88, %s90
    %p97 = scmp.eq.s32.totalorder %s17, 1
    %p98 = por %p96, %p97
    %p99 = scmp.ne.s32.totalorder %s90, %s91
    %p100 = scmp.eq.s32.totalorder %s17, 0
    %p101 = por %p99, %p100
    %p102 = scmp.ne.s32.totalorder %s90, %s91
    %p103 = scmp.eq.s32.totalorder %s18, 1
    %p104 = por %p102, %p103
    %p106 = scmp.ne.s32.totalorder %s91, %s105
    %p107 = scmp.eq.s32.totalorder %s18, 0
    %p108 = por %p106, %p107
    %s110 = sadd.s32 %s109, 1
    %p113 = scmp.eq.s32.totalorder %s12, 1
    %p114 = scmp.ne.s32.totalorder %s109, %s111
    %p115 = scmp.eq.s32.totalorder %s12, 0
    %p116 = por %p114, %p115
    %p117 = scmp.ne.s32.totalorder %s109, %s111
    %p118 = scmp.eq.s32.totalorder %s17, 1
    %p119 = por %p117, %p118
    %p120 = scmp.ne.s32.totalorder %s111, %s112
    %p121 = scmp.eq.s32.totalorder %s17, 0
    %p122 = por %p120, %p121
    %p123 = scmp.ne.s32.totalorder %s111, %s112
    %p124 = scmp.eq.s32.totalorder %s18, 1
    %p125 = por %p123, %p124
    %p127 = scmp.ne.s32.totalorder %s112, %s126
    %p128 = scmp.eq.s32.totalorder %s18, 0
    %p129 = por %p127, %p128
    %s131 = sadd.s32 %s130, 1
    %p134 = scmp.eq.s32.totalorder %s12, 1
    %p135 = scmp.ne.s32.totalorder %s130, %s132
    %p136 = scmp.eq.s32.totalorder %s12, 0
    %p137 = por %p135, %p136
    %p138 = scmp.ne.s32.totalorder %s130, %s132
    %p139 = scmp.eq.s32.totalorder %s17, 1
    %p140 = por %p138, %p139
    %p141 = scmp.ne.s32.totalorder %s132, %s133
    %p142 = scmp.eq.s32.totalorder %s17, 0
    %p143 = por %p141, %p142
    %p144 = scmp.ne.s32.totalorder %s132, %s133
    %p145 = scmp.eq.s32.totalorder %s18, 1
    %p146 = por %p144, %p145
    %p148 = scmp.ne.s32.totalorder %s133, %s147
    %p149 = scmp.eq.s32.totalorder %s18, 0
    %p150 = por %p148, %p149
    %s151 = ssub.s32 %s12, %s19
    %p152 = scmp.eq.s32.totalorder %s151, 0
    %s154 = sadd.s32 %s153, 1
    %s155 = scalar_select %p152, %s153, %s154
    %p158 = pneg %p152
    %p159 = scmp.eq.s32.totalorder %s12, 1
    %p160 = por %p158, %p159
    %p161 = scmp.ne.s32.totalorder %s153, %s156
    %p162 = scmp.eq.s32.totalorder %s12, 0
    %p163 = por %p161, %p162
    %p164 = scmp.ne.s32.totalorder %s153, %s156
    %p165 = scmp.eq.s32.totalorder %s17, 1
    %p166 = por %p164, %p165
    %p167 = scmp.ne.s32.totalorder %s156, %s157
    %p168 = scmp.eq.s32.totalorder %s17, 0
    %p169 = por %p167, %p168
    %p170 = scmp.ne.s32.totalorder %s156, %s157
    %p171 = scmp.eq.s32.totalorder %s18, 1
    %p172 = por %p170, %p171
    %p174 = scmp.ne.s32.totalorder %s157, %s173
    %p175 = scmp.eq.s32.totalorder %s18, 0
    %p176 = por %p174, %p175
    %p177 = scmp.le.s32.totalorder 1, %s12
    %p178 = scmp.lt.s32.totalorder %s12, 3
    %p179 = pnand %p177, %p178
    %p180 = pneg %p179
    // Predicated region
    $region9: #{basic_block_pallas.1} parent=5 // pred_check
      _
    $region10: #{basic_block_pallas.1} parent=5 // pred_check_branch
      %182 = sbr.rel (%p179) target = $region12
    $region11: #{basic_block_pallas.1} parent=5 // pred_region
      %s183 = ssub.s32 %s12, 1
      // Predicated region
      $region13: #{basic_block_pallas.1} parent=11 // pred_check
        %p184 = pneg %p59
      $region14: #{basic_block_pallas.1} parent=11 // pred_check_branch
        %186 = sbr.rel (%p184) target = $region16
      $region15: #{basic_block_pallas.1} parent=11 // pred_region
        _
      $region16: #{basic_block_pallas.1} parent=11 // pred_fallthru
        _
      // Predicated region
      $region17: #{basic_block_pallas.1} parent=11 // pred_check
        %p187 = pneg %p80
      $region18: #{basic_block_pallas.1} parent=11 // pred_check_branch
        %189 = sbr.rel (%p187) target = $region20
      $region19: #{basic_block_pallas.1} parent=11 // pred_region
        _
      $region20: #{basic_block_pallas.1} parent=11 // pred_fallthru
        _
      // Predicated region
      $region21: #{basic_block_pallas.1} parent=11 // pred_check
        %p190 = pneg %p101
      $region22: #{basic_block_pallas.1} parent=11 // pred_check_branch
        %192 = sbr.rel (%p190) target = $region24
      $region23: #{basic_block_pallas.1} parent=11 // pred_region
        _
      $region24: #{basic_block_pallas.1} parent=11 // pred_fallthru
        _
      // Predicated region
      $region25: #{basic_block_pallas.1} parent=11 // pred_check
        %p193 = pneg %p122
      $region26: #{basic_block_pallas.1} parent=11 // pred_check_branch
        %195 = sbr.rel (%p193) target = $region28
      $region27: #{basic_block_pallas.1} parent=11 // pred_region
        _
      $region28: #{basic_block_pallas.1} parent=11 // pred_fallthru
        _
      // Predicated region
      $region29: #{basic_block_pallas.1} parent=11 // pred_check
        %p196 = pneg %p143
      $region30: #{basic_block_pallas.1} parent=11 // pred_check_branch
        %198 = sbr.rel (%p196) target = $region32
      $region31: #{basic_block_pallas.1} parent=11 // pred_region
        _
      $region32: #{basic_block_pallas.1} parent=11 // pred_fallthru
        _
    $region12: #{basic_block_pallas.1} parent=5 // pred_fallthru
      _
    %p199 = scmp.lt.s32.totalorder %s12, 2
    // Predicated region
    $region33: #{basic_block_pallas.1} parent=5 // pred_check
      %p200 = pneg %p199
    $region34: #{basic_block_pallas.1} parent=5 // pred_check_branch
      %202 = sbr.rel (%p200) target = $region36
    $region35: #{basic_block_pallas.1} parent=5 // pred_region
      // Predicated region
      $region37: #{basic_block_pallas.1} parent=35 // pred_check
        %p203 = pneg %p32
      $region38: #{basic_block_pallas.1} parent=35 // pred_check_branch
        %205 = sbr.rel (%p203) target = $region40
      $region39: #{basic_block_pallas.1} parent=35 // pred_region
        %s206 = smul.u32 32, %s12
        %p207 = scmp.lt.s32.totalorder %s206, 63
        %s208 = scalar_select %p207, %s206, 63
        %s209 = smul.addr %s208, 8
        %s210 = scalar_lea.vmem %s0, %s209
        %s211 = smul.u32 32, %s12
      $region40: #{basic_block_pallas.1} parent=35 // pred_fallthru
        _
    $region36: #{basic_block_pallas.1} parent=5 // pred_fallthru
      _
    %p212 = scmp.le.s32.totalorder 1, %s12
    %p213 = scmp.lt.s32.totalorder %s12, 3
    %p214 = pnand %p212, %p213
    %p215 = pneg %p214
    // Predicated region
    $region41: #{basic_block_pallas.1} parent=5 // pred_check
      _
    $region42: #{basic_block_pallas.1} parent=5 // pred_check_branch
      %217 = sbr.rel (%p214) target = $region44
    $region43: #{basic_block_pallas.1} parent=5 // pred_region
      %s218 = ssub.s32 %s12, 1
      %s219 = smul.u32 32, %s17
      %p220 = scmp.lt.s32.totalorder %s219, 63
      %s221 = scalar_select %p220, %s219, 63
      %s222 = smul.addr %s221, 8
      %s223 = scalar_lea.vmem %s0, %s222
      %p224 = pneg %p38
      %p225 = pneg %p35
      %p226 = pneg %p59
      %p227 = pneg %p56
      %p228 = pneg %p80
      %p229 = pneg %p77
      %p230 = pneg %p101
      %p231 = pneg %p98
      %p232 = pneg %p122
      %p233 = pneg %p119
      %p234 = pneg %p143
      %p235 = pneg %p140
      %p236 = pneg %p169
      %p237 = pneg %p166
      %s238 = smul.u32 32, %s17
      %p239 = scmp.lt.s32.totalorder %s238, 63
      %s240 = scalar_select %p239, %s238, 63
      %s241 = smul.addr %s240, 8
      %s242 = scalar_lea.vmem %s6, %s241
      %s243 = smul.u32 32, %s17
      %p244 = scmp.lt.s32.totalorder %s243, 63
      %s245 = scalar_select %p244, %s243, 63
      %s246 = smul.addr %s245, 8
      %s247 = scalar_lea.vmem %s0, %s246
      %s248 = smul.u32 32, %s17
      %s249 = smul.u32 32, %s17
      %p250 = scmp.lt.s32.totalorder %s249, 63
      %s251 = scalar_select %p250, %s249, 63
      %s252 = smul.addr %s251, 8
      %s253 = scalar_lea.vmem %s6, %s252
      %s254 = smul.u32 32, %s17
      %256 = vst [vmem:[#allocation2] sm:$0x1] 0.0
      %257 = vst [vmem:[#allocation2 + $0x101] sm:$0x1] 0.0
      %v258 = vld [vmem:[%s247] sm:$0xff]
      %v259 = vld [vmem:[%s247 + $0x8] sm:$0xff]
      %v260 = vld [vmem:[%s247 + $0x10] sm:$0xff]
      %v261 = vld [vmem:[%s247 + $0x18] sm:$0xff]
      %v262 = vld [vmem:[%s247 + $0x20] sm:$0xff]
      %v263 = vld [vmem:[%s247 + $0x28] sm:$0xff]
      %v264 = vld [vmem:[%s247 + $0x30] sm:$0xff]
      %v265 = vld [vmem:[%s247 + $0x38] sm:$0xff]
      %v266 = vld [vmem:[%s247 + $0x40] sm:$0xff]
      %v267 = vld [vmem:[%s247 + $0x48] sm:$0xff]
      %v268 = vld [vmem:[%s247 + $0x50] sm:$0xff]
      %v269 = vld [vmem:[%s247 + $0x58] sm:$0xff]
      %v270 = vld [vmem:[%s247 + $0x60] sm:$0xff]
      %v271 = vld [vmem:[%s247 + $0x68] sm:$0xff]
      %v272 = vld [vmem:[%s247 + $0x70] sm:$0xff]
      %v273 = vld [vmem:[%s247 + $0x78] sm:$0xff]
      %v274 = vld [vmem:[%s247 + $0x80] sm:$0xff]
      %v275 = vld [vmem:[%s247 + $0x88] sm:$0xff]
      %v276 = vld [vmem:[%s247 + $0x90] sm:$0xff]
      %v277 = vld [vmem:[%s247 + $0x98] sm:$0xff]
      %v278 = vld [vmem:[%s247 + $0xa0] sm:$0xff]
      %v279 = vld [vmem:[%s247 + $0xa8] sm:$0xff]
      %v280 = vld [vmem:[%s247 + $0xb0] sm:$0xff]
      %v281 = vld [vmem:[%s247 + $0xb8] sm:$0xff]
      %v282 = vld [vmem:[%s247 + $0xc0] sm:$0xff]
      %v283 = vld [vmem:[%s247 + $0xc8] sm:$0xff]
      %v284 = vld [vmem:[%s247 + $0xd0] sm:$0xff]
      %v285 = vld [vmem:[%s247 + $0xd8] sm:$0xff]
      %v286 = vld [vmem:[%s247 + $0xe0] sm:$0xff]
      %v287 = vld [vmem:[%s247 + $0xe8] sm:$0xff]
      %v288 = vld [vmem:[%s247 + $0xf0] sm:$0xff]
      %v289 = vld [vmem:[%s247 + $0xf8] sm:$0xff]
      %v290 = vld [vmem:[%s4] sm:$0xff]
      %v291 = vld [vmem:[%s4 + $0x8] sm:$0xff]
      %v292 = vld [vmem:[%s4 + $0x10] sm:$0xff]
      %v293 = vld [vmem:[%s4 + $0x18] sm:$0xff]
      %v294 = vld [vmem:[%s4 + $0x20] sm:$0xff]
      %v295 = vld [vmem:[%s4 + $0x28] sm:$0xff]
      %v296 = vld [vmem:[%s4 + $0x30] sm:$0xff]
      %v297 = vld [vmem:[%s4 + $0x38] sm:$0xff]
      %v298 = vld [vmem:[%s4 + $0x40] sm:$0xff]
      %v299 = vld [vmem:[%s4 + $0x48] sm:$0xff]
      %v300 = vld [vmem:[%s4 + $0x50] sm:$0xff]
      %v301 = vld [vmem:[%s4 + $0x58] sm:$0xff]
      %v302 = vld [vmem:[%s4 + $0x60] sm:$0xff]
      %v303 = vld [vmem:[%s4 + $0x68] sm:$0xff]
      %v304 = vld [vmem:[%s4 + $0x70] sm:$0xff]
      %v305 = vld [vmem:[%s4 + $0x78] sm:$0xff]
      %v306 = vld [vmem:[%s4 + $0x80] sm:$0xff]
      %v307 = vld [vmem:[%s4 + $0x88] sm:$0xff]
      %v308 = vld [vmem:[%s4 + $0x90] sm:$0xff]
      %v309 = vld [vmem:[%s4 + $0x98] sm:$0xff]
      %v310 = vld [vmem:[%s4 + $0xa0] sm:$0xff]
      %v311 = vld [vmem:[%s4 + $0xa8] sm:$0xff]
      %v312 = vld [vmem:[%s4 + $0xb0] sm:$0xff]
      %v313 = vld [vmem:[%s4 + $0xb8] sm:$0xff]
      %v314 = vld [vmem:[%s4 + $0xc0] sm:$0xff]
      %v315 = vld [vmem:[%s4 + $0xc8] sm:$0xff]
      %v316 = vld [vmem:[%s4 + $0xd0] sm:$0xff]
      %v317 = vld [vmem:[%s4 + $0xd8] sm:$0xff]
      %v318 = vld [vmem:[%s4 + $0xe0] sm:$0xff]
      %v319 = vld [vmem:[%s4 + $0xe8] sm:$0xff]
      %v320 = vld [vmem:[%s4 + $0xf0] sm:$0xff]
      %v321 = vld [vmem:[%s4 + $0xf8] sm:$0xff]
      %v322 = vld [vmem:[%s5] sm:$0xff]
      %v323 = vld [vmem:[%s5 + $0x8] sm:$0xff]
      %v324 = vld [vmem:[%s5 + $0x10] sm:$0xff]
      %v325 = vld [vmem:[%s5 + $0x18] sm:$0xff]
      %v326 = vld [vmem:[%s5 + $0x20] sm:$0xff]
      %v327 = vld [vmem:[%s5 + $0x28] sm:$0xff]
      %v328 = vld [vmem:[%s5 + $0x30] sm:$0xff]
      %v329 = vld [vmem:[%s5 + $0x38] sm:$0xff]
      %v330 = vld [vmem:[%s5 + $0x40] sm:$0xff]
      %v331 = vld [vmem:[%s5 + $0x48] sm:$0xff]
      %v332 = vld [vmem:[%s5 + $0x50] sm:$0xff]
      %v333 = vld [vmem:[%s5 + $0x58] sm:$0xff]
      %v334 = vld [vmem:[%s5 + $0x60] sm:$0xff]
      %v335 = vld [vmem:[%s5 + $0x68] sm:$0xff]
      %v336 = vld [vmem:[%s5 + $0x70] sm:$0xff]
      %v337 = vld [vmem:[%s5 + $0x78] sm:$0xff]
      %v338 = vld [vmem:[%s5 + $0x80] sm:$0xff]
      %v339 = vld [vmem:[%s5 + $0x88] sm:$0xff]
      %v340 = vld [vmem:[%s5 + $0x90] sm:$0xff]
      %v341 = vld [vmem:[%s5 + $0x98] sm:$0xff]
      %v342 = vld [vmem:[%s5 + $0xa0] sm:$0xff]
      %v343 = vld [vmem:[%s5 + $0xa8] sm:$0xff]
      %v344 = vld [vmem:[%s5 + $0xb0] sm:$0xff]
      %v345 = vld [vmem:[%s5 + $0xb8] sm:$0xff]
      %v346 = vld [vmem:[%s5 + $0xc0] sm:$0xff]
      %v347 = vld [vmem:[%s5 + $0xc8] sm:$0xff]
      %v348 = vld [vmem:[%s5 + $0xd0] sm:$0xff]
      %v349 = vld [vmem:[%s5 + $0xd8] sm:$0xff]
      %v350 = vld [vmem:[%s5 + $0xe0] sm:$0xff]
      %v351 = vld [vmem:[%s5 + $0xe8] sm:$0xff]
      %v352 = vld [vmem:[%s5 + $0xf0] sm:$0xff]
      %v353 = vld [vmem:[%s5 + $0xf8] sm:$0xff]
      %v354 = vld [vmem:[%s3] sm:$0x1]
      %v355 = vld [vmem:[%s3 + $0x1] sm:$0x1]
      %v356 = vld [vmem:[%s3 + $0x2] sm:$0x1]
      %v357 = vld [vmem:[%s3 + $0x3] sm:$0x1]
      %358 = vst [vmem:[#allocation2 + $0x1] sm:$0xff] %v258
      %359 = vst [vmem:[#allocation2 + $0x9] sm:$0xff] %v259
      %360 = vst [vmem:[#allocation2 + $0x11] sm:$0xff] %v260
      %361 = vst [vmem:[#allocation2 + $0x19] sm:$0xff] %v261
      %362 = vst [vmem:[#allocation2 + $0x21] sm:$0xff] %v262
      %363 = vst [vmem:[#allocation2 + $0x29] sm:$0xff] %v263
      %364 = vst [vmem:[#allocation2 + $0x31] sm:$0xff] %v264
      %365 = vst [vmem:[#allocation2 + $0x39] sm:$0xff] %v265
      %366 = vst [vmem:[#allocation2 + $0x41] sm:$0xff] %v266
      %367 = vst [vmem:[#allocation2 + $0x49] sm:$0xff] %v267
      %368 = vst [vmem:[#allocation2 + $0x51] sm:$0xff] %v268
      %369 = vst [vmem:[#allocation2 + $0x59] sm:$0xff] %v269
      %370 = vst [vmem:[#allocation2 + $0x61] sm:$0xff] %v270
      %371 = vst [vmem:[#allocation2 + $0x69] sm:$0xff] %v271
      %372 = vst [vmem:[#allocation2 + $0x71] sm:$0xff] %v272
      %373 = vst [vmem:[#allocation2 + $0x79] sm:$0xff] %v273
      %374 = vst [vmem:[#allocation2 + $0x81] sm:$0xff] %v274
      %375 = vst [vmem:[#allocation2 + $0x89] sm:$0xff] %v275
      %376 = vst [vmem:[#allocation2 + $0x91] sm:$0xff] %v276
      %377 = vst [vmem:[#allocation2 + $0x99] sm:$0xff] %v277
      %378 = vst [vmem:[#allocation2 + $0xa1] sm:$0xff] %v278
      %379 = vst [vmem:[#allocation2 + $0xa9] sm:$0xff] %v279
      %380 = vst [vmem:[#allocation2 + $0xb1] sm:$0xff] %v280
      %381 = vst [vmem:[#allocation2 + $0xb9] sm:$0xff] %v281
      %382 = vst [vmem:[#allocation2 + $0xc1] sm:$0xff] %v282
      %383 = vst [vmem:[#allocation2 + $0xc9] sm:$0xff] %v283
      %384 = vst [vmem:[#allocation2 + $0xd1] sm:$0xff] %v284
      %385 = vst [vmem:[#allocation2 + $0xd9] sm:$0xff] %v285
      %386 = vst [vmem:[#allocation2 + $0xe1] sm:$0xff] %v286
      %387 = vst [vmem:[#allocation2 + $0xe9] sm:$0xff] %v287
      %388 = vst [vmem:[#allocation2 + $0xf1] sm:$0xff] %v288
      %389 = vst [vmem:[#allocation2 + $0xf9] sm:$0xff] %v289
      %v390 = vld [vmem:[#allocation2] sm:$0xff]
      %v391 = vld [vmem:[#allocation2 + $0x8] sm:$0xff]
      %v392 = vld [vmem:[#allocation2 + $0x10] sm:$0xff]
      %v393 = vld [vmem:[#allocation2 + $0x18] sm:$0xff]
      %v394 = vld [vmem:[#allocation2 + $0x20] sm:$0xff]
      %v395 = vld [vmem:[#allocation2 + $0x28] sm:$0xff]
      %v396 = vld [vmem:[#allocation2 + $0x30] sm:$0xff]
      %v397 = vld [vmem:[#allocation2 + $0x38] sm:$0xff]
      %v398 = vld [vmem:[#allocation2 + $0x40] sm:$0xff]
      %v399 = vld [vmem:[#allocation2 + $0x48] sm:$0xff]
      %v400 = vld [vmem:[#allocation2 + $0x50] sm:$0xff]
      %v401 = vld [vmem:[#allocation2 + $0x58] sm:$0xff]
      %v402 = vld [vmem:[#allocation2 + $0x60] sm:$0xff]
      %v403 = vld [vmem:[#allocation2 + $0x68] sm:$0xff]
      %v404 = vld [vmem:[#allocation2 + $0x70] sm:$0xff]
      %v405 = vld [vmem:[#allocation2 + $0x78] sm:$0xff]
      %v406 = vld [vmem:[#allocation2 + $0x80] sm:$0xff]
      %v407 = vld [vmem:[#allocation2 + $0x88] sm:$0xff]
      %v408 = vld [vmem:[#allocation2 + $0x90] sm:$0xff]
      %v409 = vld [vmem:[#allocation2 + $0x98] sm:$0xff]
      %v410 = vld [vmem:[#allocation2 + $0xa0] sm:$0xff]
      %v411 = vld [vmem:[#allocation2 + $0xa8] sm:$0xff]
      %v412 = vld [vmem:[#allocation2 + $0xb0] sm:$0xff]
      %v413 = vld [vmem:[#allocation2 + $0xb8] sm:$0xff]
      %v414 = vld [vmem:[#allocation2 + $0xc0] sm:$0xff]
      %v415 = vld [vmem:[#allocation2 + $0xc8] sm:$0xff]
      %v416 = vld [vmem:[#allocation2 + $0xd0] sm:$0xff]
      %v417 = vld [vmem:[#allocation2 + $0xd8] sm:$0xff]
      %v418 = vld [vmem:[#allocation2 + $0xe0] sm:$0xff]
      %v419 = vld [vmem:[#allocation2 + $0xe8] sm:$0xff]
      %v420 = vld [vmem:[#allocation2 + $0xf0] sm:$0xff]
      %v421 = vld [vmem:[#allocation2 + $0xf8] sm:$0xff]
      %423 = vset.pattern.permute.xlu0 0
      %424 = vperm.xlu0 %423, %v290
      %v425 = vpop.permute.xlu0 %424
      %428 = vset.pattern.permute.xlu0 0
      %429 = vperm.xlu0 %428, %v291
      %v430 = vpop.permute.xlu0 %429
      %433 = vset.pattern.permute.xlu0 0
      %434 = vperm.xlu0 %433, %v292
      %v435 = vpop.permute.xlu0 %434
      %438 = vset.pattern.permute.xlu0 0
      %439 = vperm.xlu0 %438, %v293
      %v440 = vpop.permute.xlu0 %439
      %443 = vset.pattern.permute.xlu0 0
      %444 = vperm.xlu0 %443, %v294
      %v445 = vpop.permute.xlu0 %444
      %448 = vset.pattern.permute.xlu0 0
      %449 = vperm.xlu0 %448, %v295
      %v450 = vpop.permute.xlu0 %449
      %453 = vset.pattern.permute.xlu0 0
      %454 = vperm.xlu0 %453, %v296
      %v455 = vpop.permute.xlu0 %454
      %458 = vset.pattern.permute.xlu0 0
      %459 = vperm.xlu0 %458, %v297
      %v460 = vpop.permute.xlu0 %459
      %463 = vset.pattern.permute.xlu0 0
      %464 = vperm.xlu0 %463, %v298
      %v465 = vpop.permute.xlu0 %464
      %468 = vset.pattern.permute.xlu0 0
      %469 = vperm.xlu0 %468, %v299
      %v470 = vpop.permute.xlu0 %469
      %473 = vset.pattern.permute.xlu0 0
      %474 = vperm.xlu0 %473, %v300
      %v475 = vpop.permute.xlu0 %474
      %478 = vset.pattern.permute.xlu0 0
      %479 = vperm.xlu0 %478, %v301
      %v480 = vpop.permute.xlu0 %479
      %483 = vset.pattern.permute.xlu0 0
      %484 = vperm.xlu0 %483, %v302
      %v485 = vpop.permute.xlu0 %484
      %488 = vset.pattern.permute.xlu0 0
      %489 = vperm.xlu0 %488, %v303
      %v490 = vpop.permute.xlu0 %489
      %493 = vset.pattern.permute.xlu0 0
      %494 = vperm.xlu0 %493, %v304
      %v495 = vpop.permute.xlu0 %494
      %498 = vset.pattern.permute.xlu0 0
      %499 = vperm.xlu0 %498, %v305
      %v500 = vpop.permute.xlu0 %499
      %503 = vset.pattern.permute.xlu0 0
      %504 = vperm.xlu0 %503, %v306
      %v505 = vpop.permute.xlu0 %504
      %508 = vset.pattern.permute.xlu0 0
      %509 = vperm.xlu0 %508, %v307
      %v510 = vpop.permute.xlu0 %509
      %513 = vset.pattern.permute.xlu0 0
      %514 = vperm.xlu0 %513, %v308
      %v515 = vpop.permute.xlu0 %514
      %518 = vset.pattern.permute.xlu0 0
      %519 = vperm.xlu0 %518, %v309
      %v520 = vpop.permute.xlu0 %519
      %523 = vset.pattern.permute.xlu0 0
      %524 = vperm.xlu0 %523, %v310
      %v525 = vpop.permute.xlu0 %524
      %528 = vset.pattern.permute.xlu0 0
      %529 = vperm.xlu0 %528, %v311
      %v530 = vpop.permute.xlu0 %529
      %533 = vset.pattern.permute.xlu0 0
      %534 = vperm.xlu0 %533, %v312
      %v535 = vpop.permute.xlu0 %534
      %538 = vset.pattern.permute.xlu0 0
      %539 = vperm.xlu0 %538, %v313
      %v540 = vpop.permute.xlu0 %539
      %543 = vset.pattern.permute.xlu0 0
      %544 = vperm.xlu0 %543, %v314
      %v545 = vpop.permute.xlu0 %544
      %548 = vset.pattern.permute.xlu0 0
      %549 = vperm.xlu0 %548, %v315
      %v550 = vpop.permute.xlu0 %549
      %553 = vset.pattern.permute.xlu0 0
      %554 = vperm.xlu0 %553, %v316
      %v555 = vpop.permute.xlu0 %554
      %558 = vset.pattern.permute.xlu0 0
      %559 = vperm.xlu0 %558, %v317
      %v560 = vpop.permute.xlu0 %559
      %563 = vset.pattern.permute.xlu0 0
      %564 = vperm.xlu0 %563, %v318
      %v565 = vpop.permute.xlu0 %564
      %568 = vset.pattern.permute.xlu0 0
      %569 = vperm.xlu0 %568, %v319
      %v570 = vpop.permute.xlu0 %569
      %573 = vset.pattern.permute.xlu0 0
      %574 = vperm.xlu0 %573, %v320
      %v575 = vpop.permute.xlu0 %574
      %578 = vset.pattern.permute.xlu0 0
      %579 = vperm.xlu0 %578, %v321
      %v580 = vpop.permute.xlu0 %579
      %v582 = vmul.f32 %v390, %v425
      %v583 = vmul.f32 %v391, %v430
      %v584 = vmul.f32 %v392, %v435
      %v585 = vmul.f32 %v393, %v440
      %v586 = vmul.f32 %v394, %v445
      %v587 = vmul.f32 %v395, %v450
      %v588 = vmul.f32 %v396, %v455
      %v589 = vmul.f32 %v397, %v460
      %v590 = vmul.f32 %v398, %v465
      %v591 = vmul.f32 %v399, %v470
      %v592 = vmul.f32 %v400, %v475
      %v593 = vmul.f32 %v401, %v480
      %v594 = vmul.f32 %v402, %v485
      %v595 = vmul.f32 %v403, %v490
      %v596 = vmul.f32 %v404, %v495
      %v597 = vmul.f32 %v405, %v500
      %v598 = vmul.f32 %v406, %v505
      %v599 = vmul.f32 %v407, %v510
      %v600 = vmul.f32 %v408, %v515
      %v601 = vmul.f32 %v409, %v520
      %v602 = vmul.f32 %v410, %v525
      %v603 = vmul.f32 %v411, %v530
      %v604 = vmul.f32 %v412, %v535
      %v605 = vmul.f32 %v413, %v540
      %v606 = vmul.f32 %v414, %v545
      %v607 = vmul.f32 %v415, %v550
      %v608 = vmul.f32 %v416, %v555
      %v609 = vmul.f32 %v417, %v560
      %v610 = vmul.f32 %v418, %v565
      %v611 = vmul.f32 %v419, %v570
      %v612 = vmul.f32 %v420, %v575
      %v613 = vmul.f32 %v421, %v580
      %v614 = vpack.c.bf16 %v583, %v582
      %v615 = vpack.c.bf16 %v585, %v584
      %v616 = vpack.c.bf16 %v587, %v586
      %v617 = vpack.c.bf16 %v589, %v588
      %v618 = vpack.c.bf16 %v591, %v590
      %v619 = vpack.c.bf16 %v593, %v592
      %v620 = vpack.c.bf16 %v595, %v594
      %v621 = vpack.c.bf16 %v597, %v596
      %v622 = vpack.c.bf16 %v599, %v598
      %v623 = vpack.c.bf16 %v601, %v600
      %v624 = vpack.c.bf16 %v603, %v602
      %v625 = vpack.c.bf16 %v605, %v604
      %v626 = vpack.c.bf16 %v607, %v606
      %v627 = vpack.c.bf16 %v609, %v608
      %v628 = vpack.c.bf16 %v611, %v610
      %v629 = vpack.c.bf16 %v613, %v612
      %v630 = vpack.c.bf16 %v259, %v258
      %v631 = vpack.c.bf16 %v261, %v260
      %v632 = vpack.c.bf16 %v263, %v262
      %v633 = vpack.c.bf16 %v265, %v264
      %v634 = vpack.c.bf16 %v267, %v266
      %v635 = vpack.c.bf16 %v269, %v268
      %v636 = vpack.c.bf16 %v271, %v270
      %v637 = vpack.c.bf16 %v273, %v272
      %v638 = vpack.c.bf16 %v275, %v274
      %v639 = vpack.c.bf16 %v277, %v276
      %v640 = vpack.c.bf16 %v279, %v278
      %v641 = vpack.c.bf16 %v281, %v280
      %v642 = vpack.c.bf16 %v283, %v282
      %v643 = vpack.c.bf16 %v285, %v284
      %v644 = vpack.c.bf16 %v287, %v286
      %v645 = vpack.c.bf16 %v289, %v288
      %v646 = vld [vmem:[#allocation2 + $0x2] sm:$0xff]
      %v647 = vld [vmem:[#allocation2 + $0xa] sm:$0xff]
      %v648 = vld [vmem:[#allocation2 + $0x12] sm:$0xff]
      %v649 = vld [vmem:[#allocation2 + $0x1a] sm:$0xff]
      %v650 = vld [vmem:[#allocation2 + $0x22] sm:$0xff]
      %v651 = vld [vmem:[#allocation2 + $0x2a] sm:$0xff]
      %v652 = vld [vmem:[#allocation2 + $0x32] sm:$0xff]
      %v653 = vld [vmem:[#allocation2 + $0x3a] sm:$0xff]
      %v654 = vld [vmem:[#allocation2 + $0x42] sm:$0xff]
      %v655 = vld [vmem:[#allocation2 + $0x4a] sm:$0xff]
      %v656 = vld [vmem:[#allocation2 + $0x52] sm:$0xff]
      %v657 = vld [vmem:[#allocation2 + $0x5a] sm:$0xff]
      %v658 = vld [vmem:[#allocation2 + $0x62] sm:$0xff]
      %v659 = vld [vmem:[#allocation2 + $0x6a] sm:$0xff]
      %v660 = vld [vmem:[#allocation2 + $0x72] sm:$0xff]
      %v661 = vld [vmem:[#allocation2 + $0x7a] sm:$0xff]
      %v662 = vld [vmem:[#allocation2 + $0x82] sm:$0xff]
      %v663 = vld [vmem:[#allocation2 + $0x8a] sm:$0xff]
      %v664 = vld [vmem:[#allocation2 + $0x92] sm:$0xff]
      %v665 = vld [vmem:[#allocation2 + $0x9a] sm:$0xff]
      %v666 = vld [vmem:[#allocation2 + $0xa2] sm:$0xff]
      %v667 = vld [vmem:[#allocation2 + $0xaa] sm:$0xff]
      %v668 = vld [vmem:[#allocation2 + $0xb2] sm:$0xff]
      %v669 = vld [vmem:[#allocation2 + $0xba] sm:$0xff]
      %v670 = vld [vmem:[#allocation2 + $0xc2] sm:$0xff]
      %v671 = vld [vmem:[#allocation2 + $0xca] sm:$0xff]
      %v672 = vld [vmem:[#allocation2 + $0xd2] sm:$0xff]
      %v673 = vld [vmem:[#allocation2 + $0xda] sm:$0xff]
      %v674 = vld [vmem:[#allocation2 + $0xe2] sm:$0xff]
      %v675 = vld [vmem:[#allocation2 + $0xea] sm:$0xff]
      %v676 = vld [vmem:[#allocation2 + $0xf2] sm:$0xff]
      %v677 = vld [vmem:[#allocation2 + $0xfa] sm:$0xff]
      %679 = vset.pattern.permute.xlu0 0
      %680 = vperm.xlu0 %679, %v322
      %v681 = vpop.permute.xlu0 %680
      %684 = vset.pattern.permute.xlu0 0
      %685 = vperm.xlu0 %684, %v323
      %v686 = vpop.permute.xlu0 %685
      %689 = vset.pattern.permute.xlu0 0
      %690 = vperm.xlu0 %689, %v324
      %v691 = vpop.permute.xlu0 %690
      %694 = vset.pattern.permute.xlu0 0
      %695 = vperm.xlu0 %694, %v325
      %v696 = vpop.permute.xlu0 %695
      %699 = vset.pattern.permute.xlu0 0
      %700 = vperm.xlu0 %699, %v326
      %v701 = vpop.permute.xlu0 %700
      %704 = vset.pattern.permute.xlu0 0
      %705 = vperm.xlu0 %704, %v327
      %v706 = vpop.permute.xlu0 %705
      %709 = vset.pattern.permute.xlu0 0
      %710 = vperm.xlu0 %709, %v328
      %v711 = vpop.permute.xlu0 %710
      %714 = vset.pattern.permute.xlu0 0
      %715 = vperm.xlu0 %714, %v329
      %v716 = vpop.permute.xlu0 %715
      %719 = vset.pattern.permute.xlu0 0
      %720 = vperm.xlu0 %719, %v330
      %v721 = vpop.permute.xlu0 %720
      %724 = vset.pattern.permute.xlu0 0
      %725 = vperm.xlu0 %724, %v331
      %v726 = vpop.permute.xlu0 %725
      %729 = vset.pattern.permute.xlu0 0
      %730 = vperm.xlu0 %729, %v332
      %v731 = vpop.permute.xlu0 %730
      %734 = vset.pattern.permute.xlu0 0
      %735 = vperm.xlu0 %734, %v333
      %v736 = vpop.permute.xlu0 %735
      %739 = vset.pattern.permute.xlu0 0
      %740 = vperm.xlu0 %739, %v334
      %v741 = vpop.permute.xlu0 %740
      %744 = vset.pattern.permute.xlu0 0
      %745 = vperm.xlu0 %744, %v335
      %v746 = vpop.permute.xlu0 %745
      %749 = vset.pattern.permute.xlu0 0
      %750 = vperm.xlu0 %749, %v336
      %v751 = vpop.permute.xlu0 %750
      %754 = vset.pattern.permute.xlu0 0
      %755 = vperm.xlu0 %754, %v337
      %v756 = vpop.permute.xlu0 %755
      %759 = vset.pattern.permute.xlu0 0
      %760 = vperm.xlu0 %759, %v338
      %v761 = vpop.permute.xlu0 %760
      %764 = vset.pattern.permute.xlu0 0
      %765 = vperm.xlu0 %764, %v339
      %v766 = vpop.permute.xlu0 %765
      %769 = vset.pattern.permute.xlu0 0
      %770 = vperm.xlu0 %769, %v340
      %v771 = vpop.permute.xlu0 %770
      %774 = vset.pattern.permute.xlu0 0
      %775 = vperm.xlu0 %774, %v341
      %v776 = vpop.permute.xlu0 %775
      %779 = vset.pattern.permute.xlu0 0
      %780 = vperm.xlu0 %779, %v342
      %v781 = vpop.permute.xlu0 %780
      %784 = vset.pattern.permute.xlu0 0
      %785 = vperm.xlu0 %784, %v343
      %v786 = vpop.permute.xlu0 %785
      %789 = vset.pattern.permute.xlu0 0
      %790 = vperm.xlu0 %789, %v344
      %v791 = vpop.permute.xlu0 %790
      %794 = vset.pattern.permute.xlu0 0
      %795 = vperm.xlu0 %794, %v345
      %v796 = vpop.permute.xlu0 %795
      %799 = vset.pattern.permute.xlu0 0
      %800 = vperm.xlu0 %799, %v346
      %v801 = vpop.permute.xlu0 %800
      %804 = vset.pattern.permute.xlu0 0
      %805 = vperm.xlu0 %804, %v347
      %v806 = vpop.permute.xlu0 %805
      %809 = vset.pattern.permute.xlu0 0
      %810 = vperm.xlu0 %809, %v348
      %v811 = vpop.permute.xlu0 %810
      %814 = vset.pattern.permute.xlu0 0
      %815 = vperm.xlu0 %814, %v349
      %v816 = vpop.permute.xlu0 %815
      %819 = vset.pattern.permute.xlu0 0
      %820 = vperm.xlu0 %819, %v350
      %v821 = vpop.permute.xlu0 %820
      %824 = vset.pattern.permute.xlu0 0
      %825 = vperm.xlu0 %824, %v351
      %v826 = vpop.permute.xlu0 %825
      %829 = vset.pattern.permute.xlu0 0
      %830 = vperm.xlu0 %829, %v352
      %v831 = vpop.permute.xlu0 %830
      %834 = vset.pattern.permute.xlu0 0
      %835 = vperm.xlu0 %834, %v353
      %v836 = vpop.permute.xlu0 %835
      %v838 = vmul.f32 %v646, %v681
      %v839 = vmul.f32 %v647, %v686
      %v840 = vmul.f32 %v648, %v691
      %v841 = vmul.f32 %v649, %v696
      %v842 = vmul.f32 %v650, %v701
      %v843 = vmul.f32 %v651, %v706
      %v844 = vmul.f32 %v652, %v711
      %v845 = vmul.f32 %v653, %v716
      %v846 = vmul.f32 %v654, %v721
      %v847 = vmul.f32 %v655, %v726
      %v848 = vmul.f32 %v656, %v731
      %v849 = vmul.f32 %v657, %v736
      %v850 = vmul.f32 %v658, %v741
      %v851 = vmul.f32 %v659, %v746
      %v852 = vmul.f32 %v660, %v751
      %v853 = vmul.f32 %v661, %v756
      %v854 = vmul.f32 %v662, %v761
      %v855 = vmul.f32 %v663, %v766
      %v856 = vmul.f32 %v664, %v771
      %v857 = vmul.f32 %v665, %v776
      %v858 = vmul.f32 %v666, %v781
      %v859 = vmul.f32 %v667, %v786
      %v860 = vmul.f32 %v668, %v791
      %v861 = vmul.f32 %v669, %v796
      %v862 = vmul.f32 %v670, %v801
      %v863 = vmul.f32 %v671, %v806
      %v864 = vmul.f32 %v672, %v811
      %v865 = vmul.f32 %v673, %v816
      %v866 = vmul.f32 %v674, %v821
      %v867 = vmul.f32 %v675, %v826
      %v868 = vmul.f32 %v676, %v831
      %v869 = vmul.f32 %v677, %v836
      %v870 = vpack.c.bf16 %v839, %v838
      %v871 = vpack.c.bf16 %v841, %v840
      %v872 = vpack.c.bf16 %v843, %v842
      %v873 = vpack.c.bf16 %v845, %v844
      %v874 = vpack.c.bf16 %v847, %v846
      %v875 = vpack.c.bf16 %v849, %v848
      %v876 = vpack.c.bf16 %v851, %v850
      %v877 = vpack.c.bf16 %v853, %v852
      %v878 = vpack.c.bf16 %v855, %v854
      %v879 = vpack.c.bf16 %v857, %v856
      %v880 = vpack.c.bf16 %v859, %v858
      %v881 = vpack.c.bf16 %v861, %v860
      %v882 = vpack.c.bf16 %v863, %v862
      %v883 = vpack.c.bf16 %v865, %v864
      %v884 = vpack.c.bf16 %v867, %v866
      %v885 = vpack.c.bf16 %v869, %v868
      %v886 = vld [vmem:[%s1] sm:$0xf]
      %v887 = vld [vmem:[%s1 + $0x4] sm:$0xf]
      %v888 = vld [vmem:[%s1 + $0x8] sm:$0xf]
      %v889 = vld [vmem:[%s1 + $0xc] sm:$0xf]
      %v890 = vld [vmem:[%s1 + $0x10] sm:$0xf]
      %v891 = vld [vmem:[%s1 + $0x14] sm:$0xf]
      %v892 = vld [vmem:[%s1 + $0x18] sm:$0xf]
      %v893 = vld [vmem:[%s1 + $0x1c] sm:$0xf]
      %v894 = vld [vmem:[%s1 + $0x20] sm:$0xf]
      %v895 = vld [vmem:[%s1 + $0x24] sm:$0xf]
      %v896 = vld [vmem:[%s1 + $0x28] sm:$0xf]
      %v897 = vld [vmem:[%s1 + $0x2c] sm:$0xf]
      %v898 = vld [vmem:[%s1 + $0x30] sm:$0xf]
      %v899 = vld [vmem:[%s1 + $0x34] sm:$0xf]
      %v900 = vld [vmem:[%s1 + $0x38] sm:$0xf]
      %v901 = vld [vmem:[%s1 + $0x3c] sm:$0xf]
      %v902 = vld [vmem:[%s1 + $0x40] sm:$0xf]
      %v903 = vld [vmem:[%s1 + $0x44] sm:$0xf]
      %v904 = vld [vmem:[%s1 + $0x48] sm:$0xf]
      %v905 = vld [vmem:[%s1 + $0x4c] sm:$0xf]
      %v906 = vld [vmem:[%s1 + $0x50] sm:$0xf]
      %v907 = vld [vmem:[%s1 + $0x54] sm:$0xf]
      %v908 = vld [vmem:[%s1 + $0x58] sm:$0xf]
      %v909 = vld [vmem:[%s1 + $0x5c] sm:$0xf]
      %v910 = vld [vmem:[%s1 + $0x60] sm:$0xf]
      %v911 = vld [vmem:[%s1 + $0x64] sm:$0xf]
      %v912 = vld [vmem:[%s1 + $0x68] sm:$0xf]
      %v913 = vld [vmem:[%s1 + $0x6c] sm:$0xf]
      %v914 = vld [vmem:[%s1 + $0x70] sm:$0xf]
      %v915 = vld [vmem:[%s1 + $0x74] sm:$0xf]
      %v916 = vld [vmem:[%s1 + $0x78] sm:$0xf]
      %v917 = vld [vmem:[%s1 + $0x7c] sm:$0xf]
      %v934 = vunpack.c.l.b16 %v902
      %v935 = vunpack.c.l.b16 %v903
      %v936 = vunpack.c.l.b16 %v904
      %v937 = vunpack.c.l.b16 %v905
      %v938 = vunpack.c.l.b16 %v906
      %v939 = vunpack.c.l.b16 %v907
      %v940 = vunpack.c.l.b16 %v908
      %v941 = vunpack.c.l.b16 %v909
      %v942 = vunpack.c.l.b16 %v910
      %v943 = vunpack.c.l.b16 %v911
      %v944 = vunpack.c.l.b16 %v912
      %v945 = vunpack.c.l.b16 %v913
      %v946 = vunpack.c.l.b16 %v914
      %v947 = vunpack.c.l.b16 %v915
      %v948 = vunpack.c.l.b16 %v916
      %v949 = vunpack.c.l.b16 %v917
      %v950 = vpack.c.b16 %v935, %v934
      %v951 = vpack.c.b16 %v937, %v936
      %v952 = vpack.c.b16 %v939, %v938
      %v953 = vpack.c.b16 %v941, %v940
      %v954 = vpack.c.b16 %v943, %v942
      %v955 = vpack.c.b16 %v945, %v944
      %v956 = vpack.c.b16 %v947, %v946
      %v957 = vpack.c.b16 %v949, %v948
      %966 = vmatprep.subr.bf16.mxu0 0
      %967 = vmatpush1.bf16.msra.mxu0 %v950
      %968 = vmatprep.subr.bf16.mxu0 0
      %969 = vmatpush1.bf16.msra.mxu0 %v951
      %970 = vmatprep.subr.bf16.mxu0 0
      %971 = vmatpush1.bf16.msra.mxu0 %v952
      %972 = vmatprep.subr.bf16.mxu0 0
      %973 = vmatpush1.bf16.msra.mxu0 %v953
      %974 = vmatprep.subr.bf16.mxu0 0
      %975 = vmatpush1.bf16.msra.mxu0 %v954
      %976 = vmatprep.subr.bf16.mxu0 0
      %977 = vmatpush1.bf16.msra.mxu0 %v955
      %978 = vmatprep.subr.bf16.mxu0 0
      %979 = vmatpush1.bf16.msra.mxu0 %v956
      %980 = vmatprep.subr.bf16.mxu0 0
      %981 = vmatpush1.bf16.msra.mxu0 %v957
      %982 = vmatprep.subr.bf16.mxu0 0
      %983 = vmatpush1.bf16.msra.mxu0 0
      %984 = vmatprep.subr.bf16.mxu0 0
      %985 = vmatpush1.bf16.msra.mxu0 0
      %986 = vmatprep.subr.bf16.mxu0 0
      %987 = vmatpush1.bf16.msra.mxu0 0
      %988 = vmatprep.subr.bf16.mxu0 0
      %989 = vmatpush1.bf16.msra.mxu0 0
      %990 = vmatprep.subr.bf16.mxu0 0
      %991 = vmatpush1.bf16.msra.mxu0 0
      %992 = vmatprep.subr.bf16.mxu0 0
      %993 = vmatpush1.bf16.msra.mxu0 0
      %994 = vmatprep.subr.bf16.mxu0 0
      %995 = vmatpush1.bf16.msra.mxu0 0
      %996 = vmatprep.subr.bf16.mxu0 0
      %997 = vmatpush1.bf16.msra.mxu0 0
      %998 = vmatprep.mubr.bf16.mxu0 0
      %999 = vmatmul.mubr.bf16.gmra.mrb[0].mxu0 %v630
      %v1000 = vpop.f32.mrb[0].mxu0
      %v1001 = vadd.f32 0.0, %v1000
      %v1002 = vpop.f32.mrb[0].mxu0
      %v1003 = vpop.f32.mrb[0].mxu0
      %v1004 = vadd.f32 0.0, %v1003
      %v1005 = vpop.f32.mrb[0].mxu0
      %1006 = vmatprep.mubr.bf16.mxu0 0
      %1007 = vmatmul.mubr.bf16.gmra.mrb[0].mxu0 %v631
      %v1008 = vpop.f32.mrb[0].mxu0
      %v1009 = vadd.f32 0.0, %v1008
      %v1010 = vpop.f32.mrb[0].mxu0
      %v1011 = vpop.f32.mrb[0].mxu0
      %v1012 = vadd.f32 0.0, %v1011
      %v1013 = vpop.f32.mrb[0].mxu0
      %1014 = vmatprep.mubr.bf16.mxu0 0
      %1015 = vmatmul.mubr.bf16.gmra.mrb[0].mxu0 %v632
      %v1016 = vpop.f32.mrb[0].mxu0
      %v1017 = vadd.f32 0.0, %v1016
      %v1018 = vpop.f32.mrb[0].mxu0
      %v1019 = vpop.f32.mrb[0].mxu0
      %v1020 = vadd.f32 0.0, %v1019
      %v1021 = vpop.f32.mrb[0].mxu0
      %1022 = vmatprep.mubr.bf16.mxu0 0
      %1023 = vmatmul.mubr.bf16.gmra.mrb[0].mxu0 %v633
      %v1024 = vpop.f32.mrb[0].mxu0
      %v1025 = vadd.f32 0.0, %v1024
      %v1026 = vpop.f32.mrb[0].mxu0
      %v1027 = vpop.f32.mrb[0].mxu0
      %v1028 = vadd.f32 0.0, %v1027
      %v1029 = vpop.f32.mrb[0].mxu0
      %1030 = vmatprep.mubr.bf16.mxu0 0
      %1031 = vmatmul.mubr.bf16.gmra.mrb[0].mxu0 %v634
      %v1032 = vpop.f32.mrb[0].mxu0
      %v1033 = vadd.f32 0.0, %v1032
      %v1034 = vpop.f32.mrb[0].mxu0
      %v1035 = vpop.f32.mrb[0].mxu0
      %v1036 = vadd.f32 0.0, %v1035
      %v1037 = vpop.f32.mrb[0].mxu0
      %1038 = vmatprep.mubr.bf16.mxu0 0
      %1039 = vmatmul.mubr.bf16.gmra.mrb[0].mxu0 %v635
      %v1040 = vpop.f32.mrb[0].mxu0
      %v1041 = vadd.f32 0.0, %v1040
      %v1042 = vpop.f32.mrb[0].mxu0
      %v1043 = vpop.f32.mrb[0].mxu0
      %v1044 = vadd.f32 0.0, %v1043
      %v1045 = vpop.f32.mrb[0].mxu0
      %1046 = vmatprep.mubr.bf16.mxu0 0
      %1047 = vmatmul.mubr.bf16.gmra.mrb[0].mxu0 %v636
      %v1048 = vpop.f32.mrb[0].mxu0
      %v1049 = vadd.f32 0.0, %v1048
      %v1050 = vpop.f32.mrb[0].mxu0
      %v1051 = vpop.f32.mrb[0].mxu0
      %v1052 = vadd.f32 0.0, %v1051
      %v1053 = vpop.f32.mrb[0].mxu0
      %1054 = vmatprep.mubr.bf16.mxu0 0
      %1055 = vmatmul.mubr.bf16.gmra.mrb[0].mxu0 %v637
      %v1056 = vpop.f32.mrb[0].mxu0
      %v1057 = vadd.f32 0.0, %v1056
      %v1058 = vpop.f32.mrb[0].mxu0
      %v1059 = vpop.f32.mrb[0].mxu0
      %v1060 = vadd.f32 0.0, %v1059
      %v1061 = vpop.f32.mrb[0].mxu0
      %1062 = vmatprep.mubr.bf16.mxu0 0
      %1063 = vmatmul.mubr.bf16.gmra.mrb[0].mxu0 %v638
      %v1064 = vpop.f32.mrb[0].mxu0
      %v1065 = vadd.f32 0.0, %v1064
      %v1066 = vpop.f32.mrb[0].mxu0
      %v1067 = vpop.f32.mrb[0].mxu0
      %v1068 = vadd.f32 0.0, %v1067
      %v1069 = vpop.f32.mrb[0].mxu0
      %1070 = vmatprep.mubr.bf16.mxu0 0
      %1071 = vmatmul.mubr.bf16.gmra.mrb[0].mxu0 %v639
      %v1072 = vpop.f32.mrb[0].mxu0
      %v1073 = vadd.f32 0.0, %v1072
      %v1074 = vpop.f32.mrb[0].mxu0
      %v1075 = vpop.f32.mrb[0].mxu0
      %v1076 = vadd.f32 0.0, %v1075
      %v1077 = vpop.f32.mrb[0].mxu0
      %1078 = vmatprep.mubr.bf16.mxu0 0
      %1079 = vmatmul.mubr.bf16.gmra.mrb[0].mxu0 %v640
      %v1080 = vpop.f32.mrb[0].mxu0
      %v1081 = vadd.f32 0.0, %v1080
      %v1082 = vpop.f32.mrb[0].mxu0
      %v1083 = vpop.f32.mrb[0].mxu0
      %v1084 = vadd.f32 0.0, %v1083
      %v1085 = vpop.f32.mrb[0].mxu0
      %1086 = vmatprep.mubr.bf16.mxu0 0
      %1087 = vmatmul.mubr.bf16.gmra.mrb[0].mxu0 %v641
      %v1088 = vpop.f32.mrb[0].mxu0
      %v1089 = vadd.f32 0.0, %v1088
      %v1090 = vpop.f32.mrb[0].mxu0
      %v1091 = vpop.f32.mrb[0].mxu0
      %v1092 = vadd.f32 0.0, %v1091
      %v1093 = vpop.f32.mrb[0].mxu0
      %1094 = vmatprep.mubr.bf16.mxu0 0
      %1095 = vmatmul.mubr.bf16.gmra.mrb[0].mxu0 %v642
      %v1096 = vpop.f32.mrb[0].mxu0
      %v1097 = vadd.f32 0.0, %v1096
      %v1098 = vpop.f32.mrb[0].mxu0
      %v1099 = vpop.f32.mrb[0].mxu0
      %v1100 = vadd.f32 0.0, %v1099
      %v1101 = vpop.f32.mrb[0].mxu0
      %1102 = vmatprep.mubr.bf16.mxu0 0
      %1103 = vmatmul.mubr.bf16.gmra.mrb[0].mxu0 %v643
      %v1104 = vpop.f32.mrb[0].mxu0
      %v1105 = vadd.f32 0.0, %v1104
      %v1106 = vpop.f32.mrb[0].mxu0
      %v1107 = vpop.f32.mrb[0].mxu0
      %v1108 = vadd.f32 0.0, %v1107
      %v1109 = vpop.f32.mrb[0].mxu0
      %1110 = vmatprep.mubr.bf16.mxu0 0
      %1111 = vmatmul.mubr.bf16.gmra.mrb[0].mxu0 %v644
      %v1112 = vpop.f32.mrb[0].mxu0
      %v1113 = vadd.f32 0.0, %v1112
      %v1114 = vpop.f32.mrb[0].mxu0
      %v1115 = vpop.f32.mrb[0].mxu0
      %v1116 = vadd.f32 0.0, %v1115
      %v1117 = vpop.f32.mrb[0].mxu0
      %1118 = vmatprep.mubr.bf16.mxu0 0
      %1119 = vmatmul.mubr.bf16.gmra.mrb[0].mxu0 %v645
      %v1120 = vpop.f32.mrb[0].mxu0
      %v1121 = vadd.f32 0.0, %v1120
      %v1122 = vpop.f32.mrb[0].mxu0
      %v1123 = vpop.f32.mrb[0].mxu0
      %v1124 = vadd.f32 0.0, %v1123
      %v1125 = vpop.f32.mrb[0].mxu0
      %1126 = vdwg.mxu0
      %v1143 = vunpack.c.l.b16 %v886
      %v1144 = vunpack.c.l.b16 %v887
      %v1145 = vunpack.c.l.b16 %v888
      %v1146 = vunpack.c.l.b16 %v889
      %v1147 = vunpack.c.l.b16 %v890
      %v1148 = vunpack.c.l.b16 %v891
      %v1149 = vunpack.c.l.b16 %v892
      %v1150 = vunpack.c.l.b16 %v893
      %v1151 = vunpack.c.l.b16 %v894
      %v1152 = vunpack.c.l.b16 %v895
      %v1153 = vunpack.c.l.b16 %v896
      %v1154 = vunpack.c.l.b16 %v897
      %v1155 = vunpack.c.l.b16 %v898
      %v1156 = vunpack.c.l.b16 %v899
      %v1157 = vunpack.c.l.b16 %v900
      %v1158 = vunpack.c.l.b16 %v901
      %v1159 = vpack.c.b16 %v1144, %v1143
      %v1160 = vpack.c.b16 %v1146, %v1145
      %v1161 = vpack.c.b16 %v1148, %v1147
      %v1162 = vpack.c.b16 %v1150, %v1149
      %v1163 = vpack.c.b16 %v1152, %v1151
      %v1164 = vpack.c.b16 %v1154, %v1153
      %v1165 = vpack.c.b16 %v1156, %v1155
      %v1166 = vpack.c.b16 %v1158, %v1157
      %1175 = vmatprep.subr.bf16.mxu0 0
      %1176 = vmatpush1.bf16.msra.mxu0 %v1159
      %1177 = vmatprep.subr.bf16.mxu0 0
      %1178 = vmatpush1.bf16.msra.mxu0 %v1160
      %1179 = vmatprep.subr.bf16.mxu0 0
      %1180 = vmatpush1.bf16.msra.mxu0 %v1161
      %1181 = vmatprep.subr.bf16.mxu0 0
      %1182 = vmatpush1.bf16.msra.mxu0 %v1162
      %1183 = vmatprep.subr.bf16.mxu0 0
      %1184 = vmatpush1.bf16.msra.mxu0 %v1163
      %1185 = vmatprep.subr.bf16.mxu0 0
      %1186 = vmatpush1.bf16.msra.mxu0 %v1164
      %1187 = vmatprep.subr.bf16.mxu0 0
      %1188 = vmatpush1.bf16.msra.mxu0 %v1165
      %1189 = vmatprep.subr.bf16.mxu0 0
      %1190 = vmatpush1.bf16.msra.mxu0 %v1166
      %1191 = vmatprep.subr.bf16.mxu0 0
      %1192 = vmatpush1.bf16.msra.mxu0 0
      %1193 = vmatprep.subr.bf16.mxu0 0
      %1194 = vmatpush1.bf16.msra.mxu0 0
      %1195 = vmatprep.subr.bf16.mxu0 0
      %1196 = vmatpush1.bf16.msra.mxu0 0
      %1197 = vmatprep.subr.bf16.mxu0 0
      %1198 = vmatpush1.bf16.msra.mxu0 0
      %1199 = vmatprep.subr.bf16.mxu0 0
      %1200 = vmatpush1.bf16.msra.mxu0 0
      %1201 = vmatprep.subr.bf16.mxu0 0
      %1202 = vmatpush1.bf16.msra.mxu0 0
      %1203 = vmatprep.subr.bf16.mxu0 0
      %1204 = vmatpush1.bf16.msra.mxu0 0
      %1205 = vmatprep.subr.bf16.mxu0 0
      %1206 = vmatpush1.bf16.msra.mxu0 0
      %1207 = vmatprep.mubr.bf16.mxu0 0
      %1208 = vmatmul.mubr.bf16.gmra.mrb[0].mxu0 %v614
      %v1209 = vpop.f32.mrb[0].mxu0
      %v1210 = vadd.f32 %v1001, %v1209
      %v1211 = vpop.f32.mrb[0].mxu0
      %v1212 = vpop.f32.mrb[0].mxu0
      %v1213 = vadd.f32 %v1004, %v1212
      %v1214 = vpop.f32.mrb[0].mxu0
      %1215 = vmatprep.mubr.bf16.mxu0 0
      %1216 = vmatmul.mubr.bf16.gmra.mrb[0].mxu0 %v615
      %v1217 = vpop.f32.mrb[0].mxu0
      %v1218 = vadd.f32 %v1009, %v1217
      %v1219 = vpop.f32.mrb[0].mxu0
      %v1220 = vpop.f32.mrb[0].mxu0
      %v1221 = vadd.f32 %v1012, %v1220
      %v1222 = vpop.f32.mrb[0].mxu0
      %1223 = vmatprep.mubr.bf16.mxu0 0
      %1224 = vmatmul.mubr.bf16.gmra.mrb[0].mxu0 %v616
      %v1225 = vpop.f32.mrb[0].mxu0
      %v1226 = vadd.f32 %v1017, %v1225
      %v1227 = vpop.f32.mrb[0].mxu0
      %v1228 = vpop.f32.mrb[0].mxu0
      %v1229 = vadd.f32 %v1020, %v1228
      %v1230 = vpop.f32.mrb[0].mxu0
      %1231 = vmatprep.mubr.bf16.mxu0 0
      %1232 = vmatmul.mubr.bf16.gmra.mrb[0].mxu0 %v617
      %v1233 = vpop.f32.mrb[0].mxu0
      %v1234 = vadd.f32 %v1025, %v1233
      %v1235 = vpop.f32.mrb[0].mxu0
      %v1236 = vpop.f32.mrb[0].mxu0
      %v1237 = vadd.f32 %v1028, %v1236
      %v1238 = vpop.f32.mrb[0].mxu0
      %1239 = vmatprep.mubr.bf16.mxu0 0
      %1240 = vmatmul.mubr.bf16.gmra.mrb[0].mxu0 %v618
      %v1241 = vpop.f32.mrb[0].mxu0
      %v1242 = vadd.f32 %v1033, %v1241
      %v1243 = vpop.f32.mrb[0].mxu0
      %v1244 = vpop.f32.mrb[0].mxu0
      %v1245 = vadd.f32 %v1036, %v1244
      %v1246 = vpop.f32.mrb[0].mxu0
      %1247 = vmatprep.mubr.bf16.mxu0 0
      %1248 = vmatmul.mubr.bf16.gmra.mrb[0].mxu0 %v619
      %v1249 = vpop.f32.mrb[0].mxu0
      %v1250 = vadd.f32 %v1041, %v1249
      %v1251 = vpop.f32.mrb[0].mxu0
      %v1252 = vpop.f32.mrb[0].mxu0
      %v1253 = vadd.f32 %v1044, %v1252
      %v1254 = vpop.f32.mrb[0].mxu0
      %1255 = vmatprep.mubr.bf16.mxu0 0
      %1256 = vmatmul.mubr.bf16.gmra.mrb[0].mxu0 %v620
      %v1257 = vpop.f32.mrb[0].mxu0
      %v1258 = vadd.f32 %v1049, %v1257
      %v1259 = vpop.f32.mrb[0].mxu0
      %v1260 = vpop.f32.mrb[0].mxu0
      %v1261 = vadd.f32 %v1052, %v1260
      %v1262 = vpop.f32.mrb[0].mxu0
      %1263 = vmatprep.mubr.bf16.mxu0 0
      %1264 = vmatmul.mubr.bf16.gmra.mrb[0].mxu0 %v621
      %v1265 = vpop.f32.mrb[0].mxu0
      %v1266 = vadd.f32 %v1057, %v1265
      %v1267 = vpop.f32.mrb[0].mxu0
      %v1268 = vpop.f32.mrb[0].mxu0
      %v1269 = vadd.f32 %v1060, %v1268
      %v1270 = vpop.f32.mrb[0].mxu0
      %1271 = vmatprep.mubr.bf16.mxu0 0
      %1272 = vmatmul.mubr.bf16.gmra.mrb[0].mxu0 %v622
      %v1273 = vpop.f32.mrb[0].mxu0
      %v1274 = vadd.f32 %v1065, %v1273
      %v1275 = vpop.f32.mrb[0].mxu0
      %v1276 = vpop.f32.mrb[0].mxu0
      %v1277 = vadd.f32 %v1068, %v1276
      %v1278 = vpop.f32.mrb[0].mxu0
      %1279 = vmatprep.mubr.bf16.mxu0 0
      %1280 = vmatmul.mubr.bf16.gmra.mrb[0].mxu0 %v623
      %v1281 = vpop.f32.mrb[0].mxu0
      %v1282 = vadd.f32 %v1073, %v1281
      %v1283 = vpop.f32.mrb[0].mxu0
      %v1284 = vpop.f32.mrb[0].mxu0
      %v1285 = vadd.f32 %v1076, %v1284
      %v1286 = vpop.f32.mrb[0].mxu0
      %1287 = vmatprep.mubr.bf16.mxu0 0
      %1288 = vmatmul.mubr.bf16.gmra.mrb[0].mxu0 %v624
      %v1289 = vpop.f32.mrb[0].mxu0
      %v1290 = vadd.f32 %v1081, %v1289
      %v1291 = vpop.f32.mrb[0].mxu0
      %v1292 = vpop.f32.mrb[0].mxu0
      %v1293 = vadd.f32 %v1084, %v1292
      %v1294 = vpop.f32.mrb[0].mxu0
      %1295 = vmatprep.mubr.bf16.mxu0 0
      %1296 = vmatmul.mubr.bf16.gmra.mrb[0].mxu0 %v625
      %v1297 = vpop.f32.mrb[0].mxu0
      %v1298 = vadd.f32 %v1089, %v1297
      %v1299 = vpop.f32.mrb[0].mxu0
      %v1300 = vpop.f32.mrb[0].mxu0
      %v1301 = vadd.f32 %v1092, %v1300
      %v1302 = vpop.f32.mrb[0].mxu0
      %1303 = vmatprep.mubr.bf16.mxu0 0
      %1304 = vmatmul.mubr.bf16.gmra.mrb[0].mxu0 %v626
      %v1305 = vpop.f32.mrb[0].mxu0
      %v1306 = vadd.f32 %v1097, %v1305
      %v1307 = vpop.f32.mrb[0].mxu0
      %v1308 = vpop.f32.mrb[0].mxu0
      %v1309 = vadd.f32 %v1100, %v1308
      %v1310 = vpop.f32.mrb[0].mxu0
      %1311 = vmatprep.mubr.bf16.mxu0 0
      %1312 = vmatmul.mubr.bf16.gmra.mrb[0].mxu0 %v627
      %v1313 = vpop.f32.mrb[0].mxu0
      %v1314 = vadd.f32 %v1105, %v1313
      %v1315 = vpop.f32.mrb[0].mxu0
      %v1316 = vpop.f32.mrb[0].mxu0
      %v1317 = vadd.f32 %v1108, %v1316
      %v1318 = vpop.f32.mrb[0].mxu0
      %1319 = vmatprep.mubr.bf16.mxu0 0
      %1320 = vmatmul.mubr.bf16.gmra.mrb[0].mxu0 %v628
      %v1321 = vpop.f32.mrb[0].mxu0
      %v1322 = vadd.f32 %v1113, %v1321
      %v1323 = vpop.f32.mrb[0].mxu0
      %v1324 = vpop.f32.mrb[0].mxu0
      %v1325 = vadd.f32 %v1116, %v1324
      %v1326 = vpop.f32.mrb[0].mxu0
      %1327 = vmatprep.mubr.bf16.mxu0 0
      %1328 = vmatmul.mubr.bf16.gmra.mrb[0].mxu0 %v629
      %v1329 = vpop.f32.mrb[0].mxu0
      %v1330 = vadd.f32 %v1121, %v1329
      %v1331 = vpop.f32.mrb[0].mxu0
      %v1332 = vpop.f32.mrb[0].mxu0
      %v1333 = vadd.f32 %v1124, %v1332
      %v1334 = vpop.f32.mrb[0].mxu0
      %1335 = vdwg.mxu0
      %v1336 = vld [vmem:[%s1 + $0x80] sm:$0xf]
      %v1337 = vld [vmem:[%s1 + $0x84] sm:$0xf]
      %v1338 = vld [vmem:[%s1 + $0x88] sm:$0xf]
      %v1339 = vld [vmem:[%s1 + $0x8c] sm:$0xf]
      %v1340 = vld [vmem:[%s1 + $0x90] sm:$0xf]
      %v1341 = vld [vmem:[%s1 + $0x94] sm:$0xf]
      %v1342 = vld [vmem:[%s1 + $0x98] sm:$0xf]
      %v1343 = vld [vmem:[%s1 + $0x9c] sm:$0xf]
      %v1344 = vld [vmem:[%s1 + $0xa0] sm:$0xf]
      %v1345 = vld [vmem:[%s1 + $0xa4] sm:$0xf]
      %v1346 = vld [vmem:[%s1 + $0xa8] sm:$0xf]
      %v1347 = vld [vmem:[%s1 + $0xac] sm:$0xf]
      %v1348 = vld [vmem:[%s1 + $0xb0] sm:$0xf]
      %v1349 = vld [vmem:[%s1 + $0xb4] sm:$0xf]
      %v1350 = vld [vmem:[%s1 + $0xb8] sm:$0xf]
      %v1351 = vld [vmem:[%s1 + $0xbc] sm:$0xf]
      %v1368 = vunpack.c.l.b16 %v1336
      %v1369 = vunpack.c.l.b16 %v1337
      %v1370 = vunpack.c.l.b16 %v1338
      %v1371 = vunpack.c.l.b16 %v1339
      %v1372 = vunpack.c.l.b16 %v1340
      %v1373 = vunpack.c.l.b16 %v1341
      %v1374 = vunpack.c.l.b16 %v1342
      %v1375 = vunpack.c.l.b16 %v1343
      %v1376 = vunpack.c.l.b16 %v1344
      %v1377 = vunpack.c.l.b16 %v1345
      %v1378 = vunpack.c.l.b16 %v1346
      %v1379 = vunpack.c.l.b16 %v1347
      %v1380 = vunpack.c.l.b16 %v1348
      %v1381 = vunpack.c.l.b16 %v1349
      %v1382 = vunpack.c.l.b16 %v1350
      %v1383 = vunpack.c.l.b16 %v1351
      %v1384 = vpack.c.b16 %v1369, %v1368
      %v1385 = vpack.c.b16 %v1371, %v1370
      %v1386 = vpack.c.b16 %v1373, %v1372
      %v1387 = vpack.c.b16 %v1375, %v1374
      %v1388 = vpack.c.b16 %v1377, %v1376
      %v1389 = vpack.c.b16 %v1379, %v1378
      %v1390 = vpack.c.b16 %v1381, %v1380
      %v1391 = vpack.c.b16 %v1383, %v1382
      %1400 = vmatprep.subr.bf16.mxu0 0
      %1401 = vmatpush1.bf16.msra.mxu0 %v1384
      %1402 = vmatprep.subr.bf16.mxu0 0
      %1403 = vmatpush1.bf16.msra.mxu0 %v1385
      %1404 = vmatprep.subr.bf16.mxu0 0
      %1405 = vmatpush1.bf16.msra.mxu0 %v1386
      %1406 = vmatprep.subr.bf16.mxu0 0
      %1407 = vmatpush1.bf16.msra.mxu0 %v1387
      %1408 = vmatprep.subr.bf16.mxu0 0
      %1409 = vmatpush1.bf16.msra.mxu0 %v1388
      %1410 = vmatprep.subr.bf16.mxu0 0
      %1411 = vmatpush1.bf16.msra.mxu0 %v1389
      %1412 = vmatprep.subr.bf16.mxu0 0
      %1413 = vmatpush1.bf16.msra.mxu0 %v1390
      %1414 = vmatprep.subr.bf16.mxu0 0
      %1415 = vmatpush1.bf16.msra.mxu0 %v1391
      %1416 = vmatprep.subr.bf16.mxu0 0
      %1417 = vmatpush1.bf16.msra.mxu0 0
      %1418 = vmatprep.subr.bf16.mxu0 0
      %1419 = vmatpush1.bf16.msra.mxu0 0
      %1420 = vmatprep.subr.bf16.mxu0 0
      %1421 = vmatpush1.bf16.msra.mxu0 0
      %1422 = vmatprep.subr.bf16.mxu0 0
      %1423 = vmatpush1.bf16.msra.mxu0 0
      %1424 = vmatprep.subr.bf16.mxu0 0
      %1425 = vmatpush1.bf16.msra.mxu0 0
      %1426 = vmatprep.subr.bf16.mxu0 0
      %1427 = vmatpush1.bf16.msra.mxu0 0
      %1428 = vmatprep.subr.bf16.mxu0 0
      %1429 = vmatpush1.bf16.msra.mxu0 0
      %1430 = vmatprep.subr.bf16.mxu0 0
      %1431 = vmatpush1.bf16.msra.mxu0 0
      %1432 = vmatprep.mubr.bf16.mxu0 0
      %1433 = vmatmul.mubr.bf16.gmra.mrb[0].mxu0 %v870
      %v1434 = vpop.f32.mrb[0].mxu0
      %v1435 = vadd.f32 0.0, %v1434
      %v1436 = vpop.f32.mrb[0].mxu0
      %v1437 = vpop.f32.mrb[0].mxu0
      %v1438 = vadd.f32 0.0, %v1437
      %v1439 = vpop.f32.mrb[0].mxu0
      %1440 = vmatprep.mubr.bf16.mxu0 0
      %1441 = vmatmul.mubr.bf16.gmra.mrb[0].mxu0 %v871
      %v1442 = vpop.f32.mrb[0].mxu0
      %v1443 = vadd.f32 0.0, %v1442
      %v1444 = vpop.f32.mrb[0].mxu0
      %v1445 = vpop.f32.mrb[0].mxu0
      %v1446 = vadd.f32 0.0, %v1445
      %v1447 = vpop.f32.mrb[0].mxu0
      %1448 = vmatprep.mubr.bf16.mxu0 0
      %1449 = vmatmul.mubr.bf16.gmra.mrb[0].mxu0 %v872
      %v1450 = vpop.f32.mrb[0].mxu0
      %v1451 = vadd.f32 0.0, %v1450
      %v1452 = vpop.f32.mrb[0].mxu0
      %v1453 = vpop.f32.mrb[0].mxu0
      %v1454 = vadd.f32 0.0, %v1453
      %v1455 = vpop.f32.mrb[0].mxu0
      %1456 = vmatprep.mubr.bf16.mxu0 0
      %1457 = vmatmul.mubr.bf16.gmra.mrb[0].mxu0 %v873
      %v1458 = vpop.f32.mrb[0].mxu0
      %v1459 = vadd.f32 0.0, %v1458
      %v1460 = vpop.f32.mrb[0].mxu0
      %v1461 = vpop.f32.mrb[0].mxu0
      %v1462 = vadd.f32 0.0, %v1461
      %v1463 = vpop.f32.mrb[0].mxu0
      %1464 = vmatprep.mubr.bf16.mxu0 0
      %1465 = vmatmul.mubr.bf16.gmra.mrb[0].mxu0 %v874
      %v1466 = vpop.f32.mrb[0].mxu0
      %v1467 = vadd.f32 0.0, %v1466
      %v1468 = vpop.f32.mrb[0].mxu0
      %v1469 = vpop.f32.mrb[0].mxu0
      %v1470 = vadd.f32 0.0, %v1469
      %v1471 = vpop.f32.mrb[0].mxu0
      %1472 = vmatprep.mubr.bf16.mxu0 0
      %1473 = vmatmul.mubr.bf16.gmra.mrb[0].mxu0 %v875
      %v1474 = vpop.f32.mrb[0].mxu0
      %v1475 = vadd.f32 0.0, %v1474
      %v1476 = vpop.f32.mrb[0].mxu0
      %v1477 = vpop.f32.mrb[0].mxu0
      %v1478 = vadd.f32 0.0, %v1477
      %v1479 = vpop.f32.mrb[0].mxu0
      %1480 = vmatprep.mubr.bf16.mxu0 0
      %1481 = vmatmul.mubr.bf16.gmra.mrb[0].mxu0 %v876
      %v1482 = vpop.f32.mrb[0].mxu0
      %v1483 = vadd.f32 0.0, %v1482
      %v1484 = vpop.f32.mrb[0].mxu0
      %v1485 = vpop.f32.mrb[0].mxu0
      %v1486 = vadd.f32 0.0, %v1485
      %v1487 = vpop.f32.mrb[0].mxu0
      %1488 = vmatprep.mubr.bf16.mxu0 0
      %1489 = vmatmul.mubr.bf16.gmra.mrb[0].mxu0 %v877
      %v1490 = vpop.f32.mrb[0].mxu0
      %v1491 = vadd.f32 0.0, %v1490
      %v1492 = vpop.f32.mrb[0].mxu0
      %v1493 = vpop.f32.mrb[0].mxu0
      %v1494 = vadd.f32 0.0, %v1493
      %v1495 = vpop.f32.mrb[0].mxu0
      %1496 = vmatprep.mubr.bf16.mxu0 0
      %1497 = vmatmul.mubr.bf16.gmra.mrb[0].mxu0 %v878
      %v1498 = vpop.f32.mrb[0].mxu0
      %v1499 = vadd.f32 0.0, %v1498
      %v1500 = vpop.f32.mrb[0].mxu0
      %v1501 = vpop.f32.mrb[0].mxu0
      %v1502 = vadd.f32 0.0, %v1501
      %v1503 = vpop.f32.mrb[0].mxu0
      %1504 = vmatprep.mubr.bf16.mxu0 0
      %1505 = vmatmul.mubr.bf16.gmra.mrb[0].mxu0 %v879
      %v1506 = vpop.f32.mrb[0].mxu0
      %v1507 = vadd.f32 0.0, %v1506
      %v1508 = vpop.f32.mrb[0].mxu0
      %v1509 = vpop.f32.mrb[0].mxu0
      %v1510 = vadd.f32 0.0, %v1509
      %v1511 = vpop.f32.mrb[0].mxu0
      %1512 = vmatprep.mubr.bf16.mxu0 0
      %1513 = vmatmul.mubr.bf16.gmra.mrb[0].mxu0 %v880
      %v1514 = vpop.f32.mrb[0].mxu0
      %v1515 = vadd.f32 0.0, %v1514
      %v1516 = vpop.f32.mrb[0].mxu0
      %v1517 = vpop.f32.mrb[0].mxu0
      %v1518 = vadd.f32 0.0, %v1517
      %v1519 = vpop.f32.mrb[0].mxu0
      %1520 = vmatprep.mubr.bf16.mxu0 0
      %1521 = vmatmul.mubr.bf16.gmra.mrb[0].mxu0 %v881
      %v1522 = vpop.f32.mrb[0].mxu0
      %v1523 = vadd.f32 0.0, %v1522
      %v1524 = vpop.f32.mrb[0].mxu0
      %v1525 = vpop.f32.mrb[0].mxu0
      %v1526 = vadd.f32 0.0, %v1525
      %v1527 = vpop.f32.mrb[0].mxu0
      %1528 = vmatprep.mubr.bf16.mxu0 0
      %1529 = vmatmul.mubr.bf16.gmra.mrb[0].mxu0 %v882
      %v1530 = vpop.f32.mrb[0].mxu0
      %v1531 = vadd.f32 0.0, %v1530
      %v1532 = vpop.f32.mrb[0].mxu0
      %v1533 = vpop.f32.mrb[0].mxu0
      %v1534 = vadd.f32 0.0, %v1533
      %v1535 = vpop.f32.mrb[0].mxu0
      %1536 = vmatprep.mubr.bf16.mxu0 0
      %1537 = vmatmul.mubr.bf16.gmra.mrb[0].mxu0 %v883
      %v1538 = vpop.f32.mrb[0].mxu0
      %v1539 = vadd.f32 0.0, %v1538
      %v1540 = vpop.f32.mrb[0].mxu0
      %v1541 = vpop.f32.mrb[0].mxu0
      %v1542 = vadd.f32 0.0, %v1541
      %v1543 = vpop.f32.mrb[0].mxu0
      %1544 = vmatprep.mubr.bf16.mxu0 0
      %1545 = vmatmul.mubr.bf16.gmra.mrb[0].mxu0 %v884
      %v1546 = vpop.f32.mrb[0].mxu0
      %v1547 = vadd.f32 0.0, %v1546
      %v1548 = vpop.f32.mrb[0].mxu0
      %v1549 = vpop.f32.mrb[0].mxu0
      %v1550 = vadd.f32 0.0, %v1549
      %v1551 = vpop.f32.mrb[0].mxu0
      %1552 = vmatprep.mubr.bf16.mxu0 0
      %1553 = vmatmul.mubr.bf16.gmra.mrb[0].mxu0 %v885
      %v1554 = vpop.f32.mrb[0].mxu0
      %v1555 = vadd.f32 0.0, %v1554
      %v1556 = vpop.f32.mrb[0].mxu0
      %v1557 = vpop.f32.mrb[0].mxu0
      %v1558 = vadd.f32 0.0, %v1557
      %v1559 = vpop.f32.mrb[0].mxu0
      %1560 = vdwg.mxu0
      %v1561 = vadd.f32 %v1210, %v1435
      %v1562 = vadd.f32 %v1213, %v1438
      %v1563 = vadd.f32 %v1218, %v1443
      %v1564 = vadd.f32 %v1221, %v1446
      %v1565 = vadd.f32 %v1226, %v1451
      %v1566 = vadd.f32 %v1229, %v1454
      %v1567 = vadd.f32 %v1234, %v1459
      %v1568 = vadd.f32 %v1237, %v1462
      %v1569 = vadd.f32 %v1242, %v1467
      %v1570 = vadd.f32 %v1245, %v1470
      %v1571 = vadd.f32 %v1250, %v1475
      %v1572 = vadd.f32 %v1253, %v1478
      %v1573 = vadd.f32 %v1258, %v1483
      %v1574 = vadd.f32 %v1261, %v1486
      %v1575 = vadd.f32 %v1266, %v1491
      %v1576 = vadd.f32 %v1269, %v1494
      %v1577 = vadd.f32 %v1274, %v1499
      %v1578 = vadd.f32 %v1277, %v1502
      %v1579 = vadd.f32 %v1282, %v1507
      %v1580 = vadd.f32 %v1285, %v1510
      %v1581 = vadd.f32 %v1290, %v1515
      %v1582 = vadd.f32 %v1293, %v1518
      %v1583 = vadd.f32 %v1298, %v1523
      %v1584 = vadd.f32 %v1301, %v1526
      %v1585 = vadd.f32 %v1306, %v1531
      %v1586 = vadd.f32 %v1309, %v1534
      %v1587 = vadd.f32 %v1314, %v1539
      %v1588 = vadd.f32 %v1317, %v1542
      %v1589 = vadd.f32 %v1322, %v1547
      %v1590 = vadd.f32 %v1325, %v1550
      %v1591 = vadd.f32 %v1330, %v1555
      %v1592 = vadd.f32 %v1333, %v1558
      %v1593 = vlaneseq
      %v1594 = vshrl.u32 %v1593, 7
      %v1595 = vsub.s32 0, %v1594
      %v1596 = vrot.slane %v354, %v1595
      %v1597 = vmul.f32 %v1561, %v1596
      %v1598 = vmul.f32 %v1562, %v1596
      %v1599 = vmul.f32 %v1563, %v1596
      %v1600 = vmul.f32 %v1564, %v1596
      %v1601 = vmul.f32 %v1565, %v1596
      %v1602 = vmul.f32 %v1566, %v1596
      %v1603 = vmul.f32 %v1567, %v1596
      %v1604 = vmul.f32 %v1568, %v1596
      %v1605 = vmul.f32 %v1569, %v1596
      %v1606 = vmul.f32 %v1570, %v1596
      %v1607 = vmul.f32 %v1571, %v1596
      %v1608 = vmul.f32 %v1572, %v1596
      %v1609 = vmul.f32 %v1573, %v1596
      %v1610 = vmul.f32 %v1574, %v1596
      %v1611 = vmul.f32 %v1575, %v1596
      %v1612 = vmul.f32 %v1576, %v1596
      %v1613 = vmul.f32 %v1577, %v1596
      %v1614 = vmul.f32 %v1578, %v1596
      %v1615 = vmul.f32 %v1579, %v1596
      %v1616 = vmul.f32 %v1580, %v1596
      %v1617 = vmul.f32 %v1581, %v1596
      %v1618 = vmul.f32 %v1582, %v1596
      %v1619 = vmul.f32 %v1583, %v1596
      %v1620 = vmul.f32 %v1584, %v1596
      %v1621 = vmul.f32 %v1585, %v1596
      %v1622 = vmul.f32 %v1586, %v1596
      %v1623 = vmul.f32 %v1587, %v1596
      %v1624 = vmul.f32 %v1588, %v1596
      %v1625 = vmul.f32 %v1589, %v1596
      %v1626 = vmul.f32 %v1590, %v1596
      %v1627 = vmul.f32 %v1591, %v1596
      %v1628 = vmul.f32 %v1592, %v1596
      %v1629 = vlaneseq
      %v1630 = vshrl.u32 %v1629, 7
      %v1631 = vsub.s32 0, %v1630
      %v1632 = vrot.slane %v355, %v1631
      %v1633 = vadd.f32 %v1597, %v1632
      %v1634 = vadd.f32 %v1598, %v1632
      %v1635 = vadd.f32 %v1599, %v1632
      %v1636 = vadd.f32 %v1600, %v1632
      %v1637 = vadd.f32 %v1601, %v1632
      %v1638 = vadd.f32 %v1602, %v1632
      %v1639 = vadd.f32 %v1603, %v1632
      %v1640 = vadd.f32 %v1604, %v1632
      %v1641 = vadd.f32 %v1605, %v1632
      %v1642 = vadd.f32 %v1606, %v1632
      %v1643 = vadd.f32 %v1607, %v1632
      %v1644 = vadd.f32 %v1608, %v1632
      %v1645 = vadd.f32 %v1609, %v1632
      %v1646 = vadd.f32 %v1610, %v1632
      %v1647 = vadd.f32 %v1611, %v1632
      %v1648 = vadd.f32 %v1612, %v1632
      %v1649 = vadd.f32 %v1613, %v1632
      %v1650 = vadd.f32 %v1614, %v1632
      %v1651 = vadd.f32 %v1615, %v1632
      %v1652 = vadd.f32 %v1616, %v1632
      %v1653 = vadd.f32 %v1617, %v1632
      %v1654 = vadd.f32 %v1618, %v1632
      %v1655 = vadd.f32 %v1619, %v1632
      %v1656 = vadd.f32 %v1620, %v1632
      %v1657 = vadd.f32 %v1621, %v1632
      %v1658 = vadd.f32 %v1622, %v1632
      %v1659 = vadd.f32 %v1623, %v1632
      %v1660 = vadd.f32 %v1624, %v1632
      %v1661 = vadd.f32 %v1625, %v1632
      %v1662 = vadd.f32 %v1626, %v1632
      %v1663 = vadd.f32 %v1627, %v1632
      %v1664 = vadd.f32 %v1628, %v1632
      %v1665 = vmax.f32 %v1633, 0.0
      %v1666 = vmax.f32 %v1634, 0.0
      %v1667 = vmax.f32 %v1635, 0.0
      %v1668 = vmax.f32 %v1636, 0.0
      %v1669 = vmax.f32 %v1637, 0.0
      %v1670 = vmax.f32 %v1638, 0.0
      %v1671 = vmax.f32 %v1639, 0.0
      %v1672 = vmax.f32 %v1640, 0.0
      %v1673 = vmax.f32 %v1641, 0.0
      %v1674 = vmax.f32 %v1642, 0.0
      %v1675 = vmax.f32 %v1643, 0.0
      %v1676 = vmax.f32 %v1644, 0.0
      %v1677 = vmax.f32 %v1645, 0.0
      %v1678 = vmax.f32 %v1646, 0.0
      %v1679 = vmax.f32 %v1647, 0.0
      %v1680 = vmax.f32 %v1648, 0.0
      %v1681 = vmax.f32 %v1649, 0.0
      %v1682 = vmax.f32 %v1650, 0.0
      %v1683 = vmax.f32 %v1651, 0.0
      %v1684 = vmax.f32 %v1652, 0.0
      %v1685 = vmax.f32 %v1653, 0.0
      %v1686 = vmax.f32 %v1654, 0.0
      %v1687 = vmax.f32 %v1655, 0.0
      %v1688 = vmax.f32 %v1656, 0.0
      %v1689 = vmax.f32 %v1657, 0.0
      %v1690 = vmax.f32 %v1658, 0.0
      %v1691 = vmax.f32 %v1659, 0.0
      %v1692 = vmax.f32 %v1660, 0.0
      %v1693 = vmax.f32 %v1661, 0.0
      %v1694 = vmax.f32 %v1662, 0.0
      %v1695 = vmax.f32 %v1663, 0.0
      %v1696 = vmax.f32 %v1664, 0.0
      %1697 = vst [vmem:[#allocation2 + $0x1] sm:$0xff] %v1665
      %1698 = vst [vmem:[#allocation2 + $0x9] sm:$0xff] %v1666
      %1699 = vst [vmem:[#allocation2 + $0x11] sm:$0xff] %v1667
      %1700 = vst [vmem:[#allocation2 + $0x19] sm:$0xff] %v1668
      %1701 = vst [vmem:[#allocation2 + $0x21] sm:$0xff] %v1669
      %1702 = vst [vmem:[#allocation2 + $0x29] sm:$0xff] %v1670
      %1703 = vst [vmem:[#allocation2 + $0x31] sm:$0xff] %v1671
      %1704 = vst [vmem:[#allocation2 + $0x39] sm:$0xff] %v1672
      %1705 = vst [vmem:[#allocation2 + $0x41] sm:$0xff] %v1673
      %1706 = vst [vmem:[#allocation2 + $0x49] sm:$0xff] %v1674
      %1707 = vst [vmem:[#allocation2 + $0x51] sm:$0xff] %v1675
      %1708 = vst [vmem:[#allocation2 + $0x59] sm:$0xff] %v1676
      %1709 = vst [vmem:[#allocation2 + $0x61] sm:$0xff] %v1677
      %1710 = vst [vmem:[#allocation2 + $0x69] sm:$0xff] %v1678
      %1711 = vst [vmem:[#allocation2 + $0x71] sm:$0xff] %v1679
      %1712 = vst [vmem:[#allocation2 + $0x79] sm:$0xff] %v1680
      %1713 = vst [vmem:[#allocation2 + $0x81] sm:$0xff] %v1681
      %1714 = vst [vmem:[#allocation2 + $0x89] sm:$0xff] %v1682
      %1715 = vst [vmem:[#allocation2 + $0x91] sm:$0xff] %v1683
      %1716 = vst [vmem:[#allocation2 + $0x99] sm:$0xff] %v1684
      %1717 = vst [vmem:[#allocation2 + $0xa1] sm:$0xff] %v1685
      %1718 = vst [vmem:[#allocation2 + $0xa9] sm:$0xff] %v1686
      %1719 = vst [vmem:[#allocation2 + $0xb1] sm:$0xff] %v1687
      %1720 = vst [vmem:[#allocation2 + $0xb9] sm:$0xff] %v1688
      %1721 = vst [vmem:[#allocation2 + $0xc1] sm:$0xff] %v1689
      %1722 = vst [vmem:[#allocation2 + $0xc9] sm:$0xff] %v1690
      %1723 = vst [vmem:[#allocation2 + $0xd1] sm:$0xff] %v1691
      %1724 = vst [vmem:[#allocation2 + $0xd9] sm:$0xff] %v1692
      %1725 = vst [vmem:[#allocation2 + $0xe1] sm:$0xff] %v1693
      %1726 = vst [vmem:[#allocation2 + $0xe9] sm:$0xff] %v1694
      %1727 = vst [vmem:[#allocation2 + $0xf1] sm:$0xff] %v1695
      %1728 = vst [vmem:[#allocation2 + $0xf9] sm:$0xff] %v1696
      %v1729 = vld [vmem:[#allocation2] sm:$0xff]
      %v1730 = vld [vmem:[#allocation2 + $0x8] sm:$0xff]
      %v1731 = vld [vmem:[#allocation2 + $0x10] sm:$0xff]
      %v1732 = vld [vmem:[#allocation2 + $0x18] sm:$0xff]
      %v1733 = vld [vmem:[#allocation2 + $0x20] sm:$0xff]
      %v1734 = vld [vmem:[#allocation2 + $0x28] sm:$0xff]
      %v1735 = vld [vmem:[#allocation2 + $0x30] sm:$0xff]
      %v1736 = vld [vmem:[#allocation2 + $0x38] sm:$0xff]
      %v1737 = vld [vmem:[#allocation2 + $0x40] sm:$0xff]
      %v1738 = vld [vmem:[#allocation2 + $0x48] sm:$0xff]
      %v1739 = vld [vmem:[#allocation2 + $0x50] sm:$0xff]
      %v1740 = vld [vmem:[#allocation2 + $0x58] sm:$0xff]
      %v1741 = vld [vmem:[#allocation2 + $0x60] sm:$0xff]
      %v1742 = vld [vmem:[#allocation2 + $0x68] sm:$0xff]
      %v1743 = vld [vmem:[#allocation2 + $0x70] sm:$0xff]
      %v1744 = vld [vmem:[#allocation2 + $0x78] sm:$0xff]
      %v1745 = vld [vmem:[#allocation2 + $0x80] sm:$0xff]
      %v1746 = vld [vmem:[#allocation2 + $0x88] sm:$0xff]
      %v1747 = vld [vmem:[#allocation2 + $0x90] sm:$0xff]
      %v1748 = vld [vmem:[#allocation2 + $0x98] sm:$0xff]
      %v1749 = vld [vmem:[#allocation2 + $0xa0] sm:$0xff]
      %v1750 = vld [vmem:[#allocation2 + $0xa8] sm:$0xff]
      %v1751 = vld [vmem:[#allocation2 + $0xb0] sm:$0xff]
      %v1752 = vld [vmem:[#allocation2 + $0xb8] sm:$0xff]
      %v1753 = vld [vmem:[#allocation2 + $0xc0] sm:$0xff]
      %v1754 = vld [vmem:[#allocation2 + $0xc8] sm:$0xff]
      %v1755 = vld [vmem:[#allocation2 + $0xd0] sm:$0xff]
      %v1756 = vld [vmem:[#allocation2 + $0xd8] sm:$0xff]
      %v1757 = vld [vmem:[#allocation2 + $0xe0] sm:$0xff]
      %v1758 = vld [vmem:[#allocation2 + $0xe8] sm:$0xff]
      %v1759 = vld [vmem:[#allocation2 + $0xf0] sm:$0xff]
      %v1760 = vld [vmem:[#allocation2 + $0xf8] sm:$0xff]
      %v1761 = vmul.f32 %v1729, %v425
      %v1762 = vmul.f32 %v1730, %v430
      %v1763 = vmul.f32 %v1731, %v435
      %v1764 = vmul.f32 %v1732, %v440
      %v1765 = vmul.f32 %v1733, %v445
      %v1766 = vmul.f32 %v1734, %v450
      %v1767 = vmul.f32 %v1735, %v455
      %v1768 = vmul.f32 %v1736, %v460
      %v1769 = vmul.f32 %v1737, %v465
      %v1770 = vmul.f32 %v1738, %v470
      %v1771 = vmul.f32 %v1739, %v475
      %v1772 = vmul.f32 %v1740, %v480
      %v1773 = vmul.f32 %v1741, %v485
      %v1774 = vmul.f32 %v1742, %v490
      %v1775 = vmul.f32 %v1743, %v495
      %v1776 = vmul.f32 %v1744, %v500
      %v1777 = vmul.f32 %v1745, %v505
      %v1778 = vmul.f32 %v1746, %v510
      %v1779 = vmul.f32 %v1747, %v515
      %v1780 = vmul.f32 %v1748, %v520
      %v1781 = vmul.f32 %v1749, %v525
      %v1782 = vmul.f32 %v1750, %v530
      %v1783 = vmul.f32 %v1751, %v535
      %v1784 = vmul.f32 %v1752, %v540
      %v1785 = vmul.f32 %v1753, %v545
      %v1786 = vmul.f32 %v1754, %v550
      %v1787 = vmul.f32 %v1755, %v555
      %v1788 = vmul.f32 %v1756, %v560
      %v1789 = vmul.f32 %v1757, %v565
      %v1790 = vmul.f32 %v1758, %v570
      %v1791 = vmul.f32 %v1759, %v575
      %v1792 = vmul.f32 %v1760, %v580
      %v1793 = vpack.c.bf16 %v1762, %v1761
      %v1794 = vpack.c.bf16 %v1764, %v1763
      %v1795 = vpack.c.bf16 %v1766, %v1765
      %v1796 = vpack.c.bf16 %v1768, %v1767
      %v1797 = vpack.c.bf16 %v1770, %v1769
      %v1798 = vpack.c.bf16 %v1772, %v1771
      %v1799 = vpack.c.bf16 %v1774, %v1773
      %v1800 = vpack.c.bf16 %v1776, %v1775
      %v1801 = vpack.c.bf16 %v1778, %v1777
      %v1802 = vpack.c.bf16 %v1780, %v1779
      %v1803 = vpack.c.bf16 %v1782, %v1781
      %v1804 = vpack.c.bf16 %v1784, %v1783
      %v1805 = vpack.c.bf16 %v1786, %v1785
      %v1806 = vpack.c.bf16 %v1788, %v1787
      %v1807 = vpack.c.bf16 %v1790, %v1789
      %v1808 = vpack.c.bf16 %v1792, %v1791
      %v1809 = vpack.c.bf16 %v1666, %v1665
      %v1810 = vpack.c.bf16 %v1668, %v1667
      %v1811 = vpack.c.bf16 %v1670, %v1669
      %v1812 = vpack.c.bf16 %v1672, %v1671
      %v1813 = vpack.c.bf16 %v1674, %v1673
      %v1814 = vpack.c.bf16 %v1676, %v1675
      %v1815 = vpack.c.bf16 %v1678, %v1677
      %v1816 = vpack.c.bf16 %v1680, %v1679
      %v1817 = vpack.c.bf16 %v1682, %v1681
      %v1818 = vpack.c.bf16 %v1684, %v1683
      %v1819 = vpack.c.bf16 %v1686, %v1685
      %v1820 = vpack.c.bf16 %v1688, %v1687
      %v1821 = vpack.c.bf16 %v1690, %v1689
      %v1822 = vpack.c.bf16 %v1692, %v1691
      %v1823 = vpack.c.bf16 %v1694, %v1693
      %v1824 = vpack.c.bf16 %v1696, %v1695
      %v1825 = vld [vmem:[#allocation2 + $0x2] sm:$0xff]
      %v1826 = vld [vmem:[#allocation2 + $0xa] sm:$0xff]
      %v1827 = vld [vmem:[#allocation2 + $0x12] sm:$0xff]
      %v1828 = vld [vmem:[#allocation2 + $0x1a] sm:$0xff]
      %v1829 = vld [vmem:[#allocation2 + $0x22] sm:$0xff]
      %v1830 = vld [vmem:[#allocation2 + $0x2a] sm:$0xff]
      %v1831 = vld [vmem:[#allocation2 + $0x32] sm:$0xff]
      %v1832 = vld [vmem:[#allocation2 + $0x3a] sm:$0xff]
      %v1833 = vld [vmem:[#allocation2 + $0x42] sm:$0xff]
      %v1834 = vld [vmem:[#allocation2 + $0x4a] sm:$0xff]
      %v1835 = vld [vmem:[#allocation2 + $0x52] sm:$0xff]
      %v1836 = vld [vmem:[#allocation2 + $0x5a] sm:$0xff]
      %v1837 = vld [vmem:[#allocation2 + $0x62] sm:$0xff]
      %v1838 = vld [vmem:[#allocation2 + $0x6a] sm:$0xff]
      %v1839 = vld [vmem:[#allocation2 + $0x72] sm:$0xff]
      %v1840 = vld [vmem:[#allocation2 + $0x7a] sm:$0xff]
      %v1841 = vld [vmem:[#allocation2 + $0x82] sm:$0xff]
      %v1842 = vld [vmem:[#allocation2 + $0x8a] sm:$0xff]
      %v1843 = vld [vmem:[#allocation2 + $0x92] sm:$0xff]
      %v1844 = vld [vmem:[#allocation2 + $0x9a] sm:$0xff]
      %v1845 = vld [vmem:[#allocation2 + $0xa2] sm:$0xff]
      %v1846 = vld [vmem:[#allocation2 + $0xaa] sm:$0xff]
      %v1847 = vld [vmem:[#allocation2 + $0xb2] sm:$0xff]
      %v1848 = vld [vmem:[#allocation2 + $0xba] sm:$0xff]
      %v1849 = vld [vmem:[#allocation2 + $0xc2] sm:$0xff]
      %v1850 = vld [vmem:[#allocation2 + $0xca] sm:$0xff]
      %v1851 = vld [vmem:[#allocation2 + $0xd2] sm:$0xff]
      %v1852 = vld [vmem:[#allocation2 + $0xda] sm:$0xff]
      %v1853 = vld [vmem:[#allocation2 + $0xe2] sm:$0xff]
      %v1854 = vld [vmem:[#allocation2 + $0xea] sm:$0xff]
      %v1855 = vld [vmem:[#allocation2 + $0xf2] sm:$0xff]
      %v1856 = vld [vmem:[#allocation2 + $0xfa] sm:$0xff]
      %v1857 = vmul.f32 %v1825, %v681
      %v1858 = vmul.f32 %v1826, %v686
      %v1859 = vmul.f32 %v1827, %v691
      %v1860 = vmul.f32 %v1828, %v696
      %v1861 = vmul.f32 %v1829, %v701
      %v1862 = vmul.f32 %v1830, %v706
      %v1863 = vmul.f32 %v1831, %v711
      %v1864 = vmul.f32 %v1832, %v716
      %v1865 = vmul.f32 %v1833, %v721
      %v1866 = vmul.f32 %v1834, %v726
      %v1867 = vmul.f32 %v1835, %v731
      %v1868 = vmul.f32 %v1836, %v736
      %v1869 = vmul.f32 %v1837, %v741
      %v1870 = vmul.f32 %v1838, %v746
      %v1871 = vmul.f32 %v1839, %v751
      %v1872 = vmul.f32 %v1840, %v756
      %v1873 = vmul.f32 %v1841, %v761
      %v1874 = vmul.f32 %v1842, %v766
      %v1875 = vmul.f32 %v1843, %v771
      %v1876 = vmul.f32 %v1844, %v776
      %v1877 = vmul.f32 %v1845, %v781
      %v1878 = vmul.f32 %v1846, %v786
      %v1879 = vmul.f32 %v1847, %v791
      %v1880 = vmul.f32 %v1848, %v796
      %v1881 = vmul.f32 %v1849, %v801
      %v1882 = vmul.f32 %v1850, %v806
      %v1883 = vmul.f32 %v1851, %v811
      %v1884 = vmul.f32 %v1852, %v816
      %v1885 = vmul.f32 %v1853, %v821
      %v1886 = vmul.f32 %v1854, %v826
      %v1887 = vmul.f32 %v1855, %v831
      %v1888 = vmul.f32 %v1856, %v836
      %v1889 = vpack.c.bf16 %v1858, %v1857
      %v1890 = vpack.c.bf16 %v1860, %v1859
      %v1891 = vpack.c.bf16 %v1862, %v1861
      %v1892 = vpack.c.bf16 %v1864, %v1863
      %v1893 = vpack.c.bf16 %v1866, %v1865
      %v1894 = vpack.c.bf16 %v1868, %v1867
      %v1895 = vpack.c.bf16 %v1870, %v1869
      %v1896 = vpack.c.bf16 %v1872, %v1871
      %v1897 = vpack.c.bf16 %v1874, %v1873
      %v1898 = vpack.c.bf16 %v1876, %v1875
      %v1899 = vpack.c.bf16 %v1878, %v1877
      %v1900 = vpack.c.bf16 %v1880, %v1879
      %v1901 = vpack.c.bf16 %v1882, %v1881
      %v1902 = vpack.c.bf16 %v1884, %v1883
      %v1903 = vpack.c.bf16 %v1886, %v1885
      %v1904 = vpack.c.bf16 %v1888, %v1887
      %v1905 = vld [vmem:[%s2] sm:$0xf]
      %v1906 = vld [vmem:[%s2 + $0x4] sm:$0xf]
      %v1907 = vld [vmem:[%s2 + $0x8] sm:$0xf]
      %v1908 = vld [vmem:[%s2 + $0xc] sm:$0xf]
      %v1909 = vld [vmem:[%s2 + $0x10] sm:$0xf]
      %v1910 = vld [vmem:[%s2 + $0x14] sm:$0xf]
      %v1911 = vld [vmem:[%s2 + $0x18] sm:$0xf]
      %v1912 = vld [vmem:[%s2 + $0x1c] sm:$0xf]
      %v1913 = vld [vmem:[%s2 + $0x20] sm:$0xf]
      %v1914 = vld [vmem:[%s2 + $0x24] sm:$0xf]
      %v1915 = vld [vmem:[%s2 + $0x28] sm:$0xf]
      %v1916 = vld [vmem:[%s2 + $0x2c] sm:$0xf]
      %v1917 = vld [vmem:[%s2 + $0x30] sm:$0xf]
      %v1918 = vld [vmem:[%s2 + $0x34] sm:$0xf]
      %v1919 = vld [vmem:[%s2 + $0x38] sm:$0xf]
      %v1920 = vld [vmem:[%s2 + $0x3c] sm:$0xf]
      %v1921 = vld [vmem:[%s2 + $0x40] sm:$0xf]
      %v1922 = vld [vmem:[%s2 + $0x44] sm:$0xf]
      %v1923 = vld [vmem:[%s2 + $0x48] sm:$0xf]
      %v1924 = vld [vmem:[%s2 + $0x4c] sm:$0xf]
      %v1925 = vld [vmem:[%s2 + $0x50] sm:$0xf]
      %v1926 = vld [vmem:[%s2 + $0x54] sm:$0xf]
      %v1927 = vld [vmem:[%s2 + $0x58] sm:$0xf]
      %v1928 = vld [vmem:[%s2 + $0x5c] sm:$0xf]
      %v1929 = vld [vmem:[%s2 + $0x60] sm:$0xf]
      %v1930 = vld [vmem:[%s2 + $0x64] sm:$0xf]
      %v1931 = vld [vmem:[%s2 + $0x68] sm:$0xf]
      %v1932 = vld [vmem:[%s2 + $0x6c] sm:$0xf]
      %v1933 = vld [vmem:[%s2 + $0x70] sm:$0xf]
      %v1934 = vld [vmem:[%s2 + $0x74] sm:$0xf]
      %v1935 = vld [vmem:[%s2 + $0x78] sm:$0xf]
      %v1936 = vld [vmem:[%s2 + $0x7c] sm:$0xf]
      %v1953 = vunpack.c.l.b16 %v1921
      %v1954 = vunpack.c.l.b16 %v1922
      %v1955 = vunpack.c.l.b16 %v1923
      %v1956 = vunpack.c.l.b16 %v1924
      %v1957 = vunpack.c.l.b16 %v1925
      %v1958 = vunpack.c.l.b16 %v1926
      %v1959 = vunpack.c.l.b16 %v1927
      %v1960 = vunpack.c.l.b16 %v1928
      %v1961 = vunpack.c.l.b16 %v1929
      %v1962 = vunpack.c.l.b16 %v1930
      %v1963 = vunpack.c.l.b16 %v1931
      %v1964 = vunpack.c.l.b16 %v1932
      %v1965 = vunpack.c.l.b16 %v1933
      %v1966 = vunpack.c.l.b16 %v1934
      %v1967 = vunpack.c.l.b16 %v1935
      %v1968 = vunpack.c.l.b16 %v1936
      %v1969 = vpack.c.b16 %v1954, %v1953
      %v1970 = vpack.c.b16 %v1956, %v1955
      %v1971 = vpack.c.b16 %v1958, %v1957
      %v1972 = vpack.c.b16 %v1960, %v1959
      %v1973 = vpack.c.b16 %v1962, %v1961
      %v1974 = vpack.c.b16 %v1964, %v1963
      %v1975 = vpack.c.b16 %v1966, %v1965
      %v1976 = vpack.c.b16 %v1968, %v1967
      %1985 = vmatprep.subr.bf16.mxu0 0
      %1986 = vmatpush1.bf16.msra.mxu0 %v1969
      %1987 = vmatprep.subr.bf16.mxu0 0
      %1988 = vmatpush1.bf16.msra.mxu0 %v1970
      %1989 = vmatprep.subr.bf16.mxu0 0
      %1990 = vmatpush1.bf16.msra.mxu0 %v1971
      %1991 = vmatprep.subr.bf16.mxu0 0
      %1992 = vmatpush1.bf16.msra.mxu0 %v1972
      %1993 = vmatprep.subr.bf16.mxu0 0
      %1994 = vmatpush1.bf16.msra.mxu0 %v1973
      %1995 = vmatprep.subr.bf16.mxu0 0
      %1996 = vmatpush1.bf16.msra.mxu0 %v1974
      %1997 = vmatprep.subr.bf16.mxu0 0
      %1998 = vmatpush1.bf16.msra.mxu0 %v1975
      %1999 = vmatprep.subr.bf16.mxu0 0
      %2000 = vmatpush1.bf16.msra.mxu0 %v1976
      %2001 = vmatprep.subr.bf16.mxu0 0
      %2002 = vmatpush1.bf16.msra.mxu0 0
      %2003 = vmatprep.subr.bf16.mxu0 0
      %2004 = vmatpush1.bf16.msra.mxu0 0
      %2005 = vmatprep.subr.bf16.mxu0 0
      %2006 = vmatpush1.bf16.msra.mxu0 0
      %2007 = vmatprep.subr.bf16.mxu0 0
      %2008 = vmatpush1.bf16.msra.mxu0 0
      %2009 = vmatprep.subr.bf16.mxu0 0
      %2010 = vmatpush1.bf16.msra.mxu0 0
      %2011 = vmatprep.subr.bf16.mxu0 0
      %2012 = vmatpush1.bf16.msra.mxu0 0
      %2013 = vmatprep.subr.bf16.mxu0 0
      %2014 = vmatpush1.bf16.msra.mxu0 0
      %2015 = vmatprep.subr.bf16.mxu0 0
      %2016 = vmatpush1.bf16.msra.mxu0 0
      %2017 = vmatprep.mubr.bf16.mxu0 0
      %2018 = vmatmul.mubr.bf16.gmra.mrb[0].mxu0 %v1809
      %v2019 = vpop.f32.mrb[0].mxu0
      %v2020 = vadd.f32 0.0, %v2019
      %v2021 = vpop.f32.mrb[0].mxu0
      %v2022 = vpop.f32.mrb[0].mxu0
      %v2023 = vadd.f32 0.0, %v2022
      %v2024 = vpop.f32.mrb[0].mxu0
      %2025 = vmatprep.mubr.bf16.mxu0 0
      %2026 = vmatmul.mubr.bf16.gmra.mrb[0].mxu0 %v1810
      %v2027 = vpop.f32.mrb[0].mxu0
      %v2028 = vadd.f32 0.0, %v2027
      %v2029 = vpop.f32.mrb[0].mxu0
      %v2030 = vpop.f32.mrb[0].mxu0
      %v2031 = vadd.f32 0.0, %v2030
      %v2032 = vpop.f32.mrb[0].mxu0
      %2033 = vmatprep.mubr.bf16.mxu0 0
      %2034 = vmatmul.mubr.bf16.gmra.mrb[0].mxu0 %v1811
      %v2035 = vpop.f32.mrb[0].mxu0
      %v2036 = vadd.f32 0.0, %v2035
      %v2037 = vpop.f32.mrb[0].mxu0
      %v2038 = vpop.f32.mrb[0].mxu0
      %v2039 = vadd.f32 0.0, %v2038
      %v2040 = vpop.f32.mrb[0].mxu0
      %2041 = vmatprep.mubr.bf16.mxu0 0
      %2042 = vmatmul.mubr.bf16.gmra.mrb[0].mxu0 %v1812
      %v2043 = vpop.f32.mrb[0].mxu0
      %v2044 = vadd.f32 0.0, %v2043
      %v2045 = vpop.f32.mrb[0].mxu0
      %v2046 = vpop.f32.mrb[0].mxu0
      %v2047 = vadd.f32 0.0, %v2046
      %v2048 = vpop.f32.mrb[0].mxu0
      %2049 = vmatprep.mubr.bf16.mxu0 0
      %2050 = vmatmul.mubr.bf16.gmra.mrb[0].mxu0 %v1813
      %v2051 = vpop.f32.mrb[0].mxu0
      %v2052 = vadd.f32 0.0, %v2051
      %v2053 = vpop.f32.mrb[0].mxu0
      %v2054 = vpop.f32.mrb[0].mxu0
      %v2055 = vadd.f32 0.0, %v2054
      %v2056 = vpop.f32.mrb[0].mxu0
      %2057 = vmatprep.mubr.bf16.mxu0 0
      %2058 = vmatmul.mubr.bf16.gmra.mrb[0].mxu0 %v1814
      %v2059 = vpop.f32.mrb[0].mxu0
      %v2060 = vadd.f32 0.0, %v2059
      %v2061 = vpop.f32.mrb[0].mxu0
      %v2062 = vpop.f32.mrb[0].mxu0
      %v2063 = vadd.f32 0.0, %v2062
      %v2064 = vpop.f32.mrb[0].mxu0
      %2065 = vmatprep.mubr.bf16.mxu0 0
      %2066 = vmatmul.mubr.bf16.gmra.mrb[0].mxu0 %v1815
      %v2067 = vpop.f32.mrb[0].mxu0
      %v2068 = vadd.f32 0.0, %v2067
      %v2069 = vpop.f32.mrb[0].mxu0
      %v2070 = vpop.f32.mrb[0].mxu0
      %v2071 = vadd.f32 0.0, %v2070
      %v2072 = vpop.f32.mrb[0].mxu0
      %2073 = vmatprep.mubr.bf16.mxu0 0
      %2074 = vmatmul.mubr.bf16.gmra.mrb[0].mxu0 %v1816
      %v2075 = vpop.f32.mrb[0].mxu0
      %v2076 = vadd.f32 0.0, %v2075
      %v2077 = vpop.f32.mrb[0].mxu0
      %v2078 = vpop.f32.mrb[0].mxu0
      %v2079 = vadd.f32 0.0, %v2078
      %v2080 = vpop.f32.mrb[0].mxu0
      %2081 = vmatprep.mubr.bf16.mxu0 0
      %2082 = vmatmul.mubr.bf16.gmra.mrb[0].mxu0 %v1817
      %v2083 = vpop.f32.mrb[0].mxu0
      %v2084 = vadd.f32 0.0, %v2083
      %v2085 = vpop.f32.mrb[0].mxu0
      %v2086 = vpop.f32.mrb[0].mxu0
      %v2087 = vadd.f32 0.0, %v2086
      %v2088 = vpop.f32.mrb[0].mxu0
      %2089 = vmatprep.mubr.bf16.mxu0 0
      %2090 = vmatmul.mubr.bf16.gmra.mrb[0].mxu0 %v1818
      %v2091 = vpop.f32.mrb[0].mxu0
      %v2092 = vadd.f32 0.0, %v2091
      %v2093 = vpop.f32.mrb[0].mxu0
      %v2094 = vpop.f32.mrb[0].mxu0
      %v2095 = vadd.f32 0.0, %v2094
      %v2096 = vpop.f32.mrb[0].mxu0
      %2097 = vmatprep.mubr.bf16.mxu0 0
      %2098 = vmatmul.mubr.bf16.gmra.mrb[0].mxu0 %v1819
      %v2099 = vpop.f32.mrb[0].mxu0
      %v2100 = vadd.f32 0.0, %v2099
      %v2101 = vpop.f32.mrb[0].mxu0
      %v2102 = vpop.f32.mrb[0].mxu0
      %v2103 = vadd.f32 0.0, %v2102
      %v2104 = vpop.f32.mrb[0].mxu0
      %2105 = vmatprep.mubr.bf16.mxu0 0
      %2106 = vmatmul.mubr.bf16.gmra.mrb[0].mxu0 %v1820
      %v2107 = vpop.f32.mrb[0].mxu0
      %v2108 = vadd.f32 0.0, %v2107
      %v2109 = vpop.f32.mrb[0].mxu0
      %v2110 = vpop.f32.mrb[0].mxu0
      %v2111 = vadd.f32 0.0, %v2110
      %v2112 = vpop.f32.mrb[0].mxu0
      %2113 = vmatprep.mubr.bf16.mxu0 0
      %2114 = vmatmul.mubr.bf16.gmra.mrb[0].mxu0 %v1821
      %v2115 = vpop.f32.mrb[0].mxu0
      %v2116 = vadd.f32 0.0, %v2115
      %v2117 = vpop.f32.mrb[0].mxu0
      %v2118 = vpop.f32.mrb[0].mxu0
      %v2119 = vadd.f32 0.0, %v2118
      %v2120 = vpop.f32.mrb[0].mxu0
      %2121 = vmatprep.mubr.bf16.mxu0 0
      %2122 = vmatmul.mubr.bf16.gmra.mrb[0].mxu0 %v1822
      %v2123 = vpop.f32.mrb[0].mxu0
      %v2124 = vadd.f32 0.0, %v2123
      %v2125 = vpop.f32.mrb[0].mxu0
      %v2126 = vpop.f32.mrb[0].mxu0
      %v2127 = vadd.f32 0.0, %v2126
      %v2128 = vpop.f32.mrb[0].mxu0
      %2129 = vmatprep.mubr.bf16.mxu0 0
      %2130 = vmatmul.mubr.bf16.gmra.mrb[0].mxu0 %v1823
      %v2131 = vpop.f32.mrb[0].mxu0
      %v2132 = vadd.f32 0.0, %v2131
      %v2133 = vpop.f32.mrb[0].mxu0
      %v2134 = vpop.f32.mrb[0].mxu0
      %v2135 = vadd.f32 0.0, %v2134
      %v2136 = vpop.f32.mrb[0].mxu0
      %2137 = vmatprep.mubr.bf16.mxu0 0
      %2138 = vmatmul.mubr.bf16.gmra.mrb[0].mxu0 %v1824
      %v2139 = vpop.f32.mrb[0].mxu0
      %v2140 = vadd.f32 0.0, %v2139
      %v2141 = vpop.f32.mrb[0].mxu0
      %v2142 = vpop.f32.mrb[0].mxu0
      %v2143 = vadd.f32 0.0, %v2142
      %v2144 = vpop.f32.mrb[0].mxu0
      %2145 = vdwg.mxu0
      %v2162 = vunpack.c.l.b16 %v1905
      %v2163 = vunpack.c.l.b16 %v1906
      %v2164 = vunpack.c.l.b16 %v1907
      %v2165 = vunpack.c.l.b16 %v1908
      %v2166 = vunpack.c.l.b16 %v1909
      %v2167 = vunpack.c.l.b16 %v1910
      %v2168 = vunpack.c.l.b16 %v1911
      %v2169 = vunpack.c.l.b16 %v1912
      %v2170 = vunpack.c.l.b16 %v1913
      %v2171 = vunpack.c.l.b16 %v1914
      %v2172 = vunpack.c.l.b16 %v1915
      %v2173 = vunpack.c.l.b16 %v1916
      %v2174 = vunpack.c.l.b16 %v1917
      %v2175 = vunpack.c.l.b16 %v1918
      %v2176 = vunpack.c.l.b16 %v1919
      %v2177 = vunpack.c.l.b16 %v1920
      %v2178 = vpack.c.b16 %v2163, %v2162
      %v2179 = vpack.c.b16 %v2165, %v2164
      %v2180 = vpack.c.b16 %v2167, %v2166
      %v2181 = vpack.c.b16 %v2169, %v2168
      %v2182 = vpack.c.b16 %v2171, %v2170
      %v2183 = vpack.c.b16 %v2173, %v2172
      %v2184 = vpack.c.b16 %v2175, %v2174
      %v2185 = vpack.c.b16 %v2177, %v2176
      %2194 = vmatprep.subr.bf16.mxu0 0
      %2195 = vmatpush1.bf16.msra.mxu0 %v2178
      %2196 = vmatprep.subr.bf16.mxu0 0
      %2197 = vmatpush1.bf16.msra.mxu0 %v2179
      %2198 = vmatprep.subr.bf16.mxu0 0
      %2199 = vmatpush1.bf16.msra.mxu0 %v2180
      %2200 = vmatprep.subr.bf16.mxu0 0
      %2201 = vmatpush1.bf16.msra.mxu0 %v2181
      %2202 = vmatprep.subr.bf16.mxu0 0
      %2203 = vmatpush1.bf16.msra.mxu0 %v2182
      %2204 = vmatprep.subr.bf16.mxu0 0
      %2205 = vmatpush1.bf16.msra.mxu0 %v2183
      %2206 = vmatprep.subr.bf16.mxu0 0
      %2207 = vmatpush1.bf16.msra.mxu0 %v2184
      %2208 = vmatprep.subr.bf16.mxu0 0
      %2209 = vmatpush1.bf16.msra.mxu0 %v2185
      %2210 = vmatprep.subr.bf16.mxu0 0
      %2211 = vmatpush1.bf16.msra.mxu0 0
      %2212 = vmatprep.subr.bf16.mxu0 0
      %2213 = vmatpush1.bf16.msra.mxu0 0
      %2214 = vmatprep.subr.bf16.mxu0 0
      %2215 = vmatpush1.bf16.msra.mxu0 0
      %2216 = vmatprep.subr.bf16.mxu0 0
      %2217 = vmatpush1.bf16.msra.mxu0 0
      %2218 = vmatprep.subr.bf16.mxu0 0
      %2219 = vmatpush1.bf16.msra.mxu0 0
      %2220 = vmatprep.subr.bf16.mxu0 0
      %2221 = vmatpush1.bf16.msra.mxu0 0
      %2222 = vmatprep.subr.bf16.mxu0 0
      %2223 = vmatpush1.bf16.msra.mxu0 0
      %2224 = vmatprep.subr.bf16.mxu0 0
      %2225 = vmatpush1.bf16.msra.mxu0 0
      %2226 = vmatprep.mubr.bf16.mxu0 0
      %2227 = vmatmul.mubr.bf16.gmra.mrb[0].mxu0 %v1793
      %v2228 = vpop.f32.mrb[0].mxu0
      %v2229 = vadd.f32 %v2020, %v2228
      %v2230 = vpop.f32.mrb[0].mxu0
      %v2231 = vpop.f32.mrb[0].mxu0
      %v2232 = vadd.f32 %v2023, %v2231
      %v2233 = vpop.f32.mrb[0].mxu0
      %2234 = vmatprep.mubr.bf16.mxu0 0
      %2235 = vmatmul.mubr.bf16.gmra.mrb[0].mxu0 %v1794
      %v2236 = vpop.f32.mrb[0].mxu0
      %v2237 = vadd.f32 %v2028, %v2236
      %v2238 = vpop.f32.mrb[0].mxu0
      %v2239 = vpop.f32.mrb[0].mxu0
      %v2240 = vadd.f32 %v2031, %v2239
      %v2241 = vpop.f32.mrb[0].mxu0
      %2242 = vmatprep.mubr.bf16.mxu0 0
      %2243 = vmatmul.mubr.bf16.gmra.mrb[0].mxu0 %v1795
      %v2244 = vpop.f32.mrb[0].mxu0
      %v2245 = vadd.f32 %v2036, %v2244
      %v2246 = vpop.f32.mrb[0].mxu0
      %v2247 = vpop.f32.mrb[0].mxu0
      %v2248 = vadd.f32 %v2039, %v2247
      %v2249 = vpop.f32.mrb[0].mxu0
      %2250 = vmatprep.mubr.bf16.mxu0 0
      %2251 = vmatmul.mubr.bf16.gmra.mrb[0].mxu0 %v1796
      %v2252 = vpop.f32.mrb[0].mxu0
      %v2253 = vadd.f32 %v2044, %v2252
      %v2254 = vpop.f32.mrb[0].mxu0
      %v2255 = vpop.f32.mrb[0].mxu0
      %v2256 = vadd.f32 %v2047, %v2255
      %v2257 = vpop.f32.mrb[0].mxu0
      %2258 = vmatprep.mubr.bf16.mxu0 0
      %2259 = vmatmul.mubr.bf16.gmra.mrb[0].mxu0 %v1797
      %v2260 = vpop.f32.mrb[0].mxu0
      %v2261 = vadd.f32 %v2052, %v2260
      %v2262 = vpop.f32.mrb[0].mxu0
      %v2263 = vpop.f32.mrb[0].mxu0
      %v2264 = vadd.f32 %v2055, %v2263
      %v2265 = vpop.f32.mrb[0].mxu0
      %2266 = vmatprep.mubr.bf16.mxu0 0
      %2267 = vmatmul.mubr.bf16.gmra.mrb[0].mxu0 %v1798
      %v2268 = vpop.f32.mrb[0].mxu0
      %v2269 = vadd.f32 %v2060, %v2268
      %v2270 = vpop.f32.mrb[0].mxu0
      %v2271 = vpop.f32.mrb[0].mxu0
      %v2272 = vadd.f32 %v2063, %v2271
      %v2273 = vpop.f32.mrb[0].mxu0
      %2274 = vmatprep.mubr.bf16.mxu0 0
      %2275 = vmatmul.mubr.bf16.gmra.mrb[0].mxu0 %v1799
      %v2276 = vpop.f32.mrb[0].mxu0
      %v2277 = vadd.f32 %v2068, %v2276
      %v2278 = vpop.f32.mrb[0].mxu0
      %v2279 = vpop.f32.mrb[0].mxu0
      %v2280 = vadd.f32 %v2071, %v2279
      %v2281 = vpop.f32.mrb[0].mxu0
      %2282 = vmatprep.mubr.bf16.mxu0 0
      %2283 = vmatmul.mubr.bf16.gmra.mrb[0].mxu0 %v1800
      %v2284 = vpop.f32.mrb[0].mxu0
      %v2285 = vadd.f32 %v2076, %v2284
      %v2286 = vpop.f32.mrb[0].mxu0
      %v2287 = vpop.f32.mrb[0].mxu0
      %v2288 = vadd.f32 %v2079, %v2287
      %v2289 = vpop.f32.mrb[0].mxu0
      %2290 = vmatprep.mubr.bf16.mxu0 0
      %2291 = vmatmul.mubr.bf16.gmra.mrb[0].mxu0 %v1801
      %v2292 = vpop.f32.mrb[0].mxu0
      %v2293 = vadd.f32 %v2084, %v2292
      %v2294 = vpop.f32.mrb[0].mxu0
      %v2295 = vpop.f32.mrb[0].mxu0
      %v2296 = vadd.f32 %v2087, %v2295
      %v2297 = vpop.f32.mrb[0].mxu0
      %2298 = vmatprep.mubr.bf16.mxu0 0
      %2299 = vmatmul.mubr.bf16.gmra.mrb[0].mxu0 %v1802
      %v2300 = vpop.f32.mrb[0].mxu0
      %v2301 = vadd.f32 %v2092, %v2300
      %v2302 = vpop.f32.mrb[0].mxu0
      %v2303 = vpop.f32.mrb[0].mxu0
      %v2304 = vadd.f32 %v2095, %v2303
      %v2305 = vpop.f32.mrb[0].mxu0
      %2306 = vmatprep.mubr.bf16.mxu0 0
      %2307 = vmatmul.mubr.bf16.gmra.mrb[0].mxu0 %v1803
      %v2308 = vpop.f32.mrb[0].mxu0
      %v2309 = vadd.f32 %v2100, %v2308
      %v2310 = vpop.f32.mrb[0].mxu0
      %v2311 = vpop.f32.mrb[0].mxu0
      %v2312 = vadd.f32 %v2103, %v2311
      %v2313 = vpop.f32.mrb[0].mxu0
      %2314 = vmatprep.mubr.bf16.mxu0 0
      %2315 = vmatmul.mubr.bf16.gmra.mrb[0].mxu0 %v1804
      %v2316 = vpop.f32.mrb[0].mxu0
      %v2317 = vadd.f32 %v2108, %v2316
      %v2318 = vpop.f32.mrb[0].mxu0
      %v2319 = vpop.f32.mrb[0].mxu0
      %v2320 = vadd.f32 %v2111, %v2319
      %v2321 = vpop.f32.mrb[0].mxu0
      %2322 = vmatprep.mubr.bf16.mxu0 0
      %2323 = vmatmul.mubr.bf16.gmra.mrb[0].mxu0 %v1805
      %v2324 = vpop.f32.mrb[0].mxu0
      %v2325 = vadd.f32 %v2116, %v2324
      %v2326 = vpop.f32.mrb[0].mxu0
      %v2327 = vpop.f32.mrb[0].mxu0
      %v2328 = vadd.f32 %v2119, %v2327
      %v2329 = vpop.f32.mrb[0].mxu0
      %2330 = vmatprep.mubr.bf16.mxu0 0
      %2331 = vmatmul.mubr.bf16.gmra.mrb[0].mxu0 %v1806
      %v2332 = vpop.f32.mrb[0].mxu0
      %v2333 = vadd.f32 %v2124, %v2332
      %v2334 = vpop.f32.mrb[0].mxu0
      %v2335 = vpop.f32.mrb[0].mxu0
      %v2336 = vadd.f32 %v2127, %v2335
      %v2337 = vpop.f32.mrb[0].mxu0
      %2338 = vmatprep.mubr.bf16.mxu0 0
      %2339 = vmatmul.mubr.bf16.gmra.mrb[0].mxu0 %v1807
      %v2340 = vpop.f32.mrb[0].mxu0
      %v2341 = vadd.f32 %v2132, %v2340
      %v2342 = vpop.f32.mrb[0].mxu0
      %v2343 = vpop.f32.mrb[0].mxu0
      %v2344 = vadd.f32 %v2135, %v2343
      %v2345 = vpop.f32.mrb[0].mxu0
      %2346 = vmatprep.mubr.bf16.mxu0 0
      %2347 = vmatmul.mubr.bf16.gmra.mrb[0].mxu0 %v1808
      %v2348 = vpop.f32.mrb[0].mxu0
      %v2349 = vadd.f32 %v2140, %v2348
      %v2350 = vpop.f32.mrb[0].mxu0
      %v2351 = vpop.f32.mrb[0].mxu0
      %v2352 = vadd.f32 %v2143, %v2351
      %v2353 = vpop.f32.mrb[0].mxu0
      %2354 = vdwg.mxu0
      %v2355 = vld [vmem:[%s2 + $0x80] sm:$0xf]
      %v2356 = vld [vmem:[%s2 + $0x84] sm:$0xf]
      %v2357 = vld [vmem:[%s2 + $0x88] sm:$0xf]
      %v2358 = vld [vmem:[%s2 + $0x8c] sm:$0xf]
      %v2359 = vld [vmem:[%s2 + $0x90] sm:$0xf]
      %v2360 = vld [vmem:[%s2 + $0x94] sm:$0xf]
      %v2361 = vld [vmem:[%s2 + $0x98] sm:$0xf]
      %v2362 = vld [vmem:[%s2 + $0x9c] sm:$0xf]
      %v2363 = vld [vmem:[%s2 + $0xa0] sm:$0xf]
      %v2364 = vld [vmem:[%s2 + $0xa4] sm:$0xf]
      %v2365 = vld [vmem:[%s2 + $0xa8] sm:$0xf]
      %v2366 = vld [vmem:[%s2 + $0xac] sm:$0xf]
      %v2367 = vld [vmem:[%s2 + $0xb0] sm:$0xf]
      %v2368 = vld [vmem:[%s2 + $0xb4] sm:$0xf]
      %v2369 = vld [vmem:[%s2 + $0xb8] sm:$0xf]
      %v2370 = vld [vmem:[%s2 + $0xbc] sm:$0xf]
      %v2387 = vunpack.c.l.b16 %v2355
      %v2388 = vunpack.c.l.b16 %v2356
      %v2389 = vunpack.c.l.b16 %v2357
      %v2390 = vunpack.c.l.b16 %v2358
      %v2391 = vunpack.c.l.b16 %v2359
      %v2392 = vunpack.c.l.b16 %v2360
      %v2393 = vunpack.c.l.b16 %v2361
      %v2394 = vunpack.c.l.b16 %v2362
      %v2395 = vunpack.c.l.b16 %v2363
      %v2396 = vunpack.c.l.b16 %v2364
      %v2397 = vunpack.c.l.b16 %v2365
      %v2398 = vunpack.c.l.b16 %v2366
      %v2399 = vunpack.c.l.b16 %v2367
      %v2400 = vunpack.c.l.b16 %v2368
      %v2401 = vunpack.c.l.b16 %v2369
      %v2402 = vunpack.c.l.b16 %v2370
      %v2403 = vpack.c.b16 %v2388, %v2387
      %v2404 = vpack.c.b16 %v2390, %v2389
      %v2405 = vpack.c.b16 %v2392, %v2391
      %v2406 = vpack.c.b16 %v2394, %v2393
      %v2407 = vpack.c.b16 %v2396, %v2395
      %v2408 = vpack.c.b16 %v2398, %v2397
      %v2409 = vpack.c.b16 %v2400, %v2399
      %v2410 = vpack.c.b16 %v2402, %v2401
      %2419 = vmatprep.subr.bf16.mxu0 0
      %2420 = vmatpush1.bf16.msra.mxu0 %v2403
      %2421 = vmatprep.subr.bf16.mxu0 0
      %2422 = vmatpush1.bf16.msra.mxu0 %v2404
      %2423 = vmatprep.subr.bf16.mxu0 0
      %2424 = vmatpush1.bf16.msra.mxu0 %v2405
      %2425 = vmatprep.subr.bf16.mxu0 0
      %2426 = vmatpush1.bf16.msra.mxu0 %v2406
      %2427 = vmatprep.subr.bf16.mxu0 0
      %2428 = vmatpush1.bf16.msra.mxu0 %v2407
      %2429 = vmatprep.subr.bf16.mxu0 0
      %2430 = vmatpush1.bf16.msra.mxu0 %v2408
      %2431 = vmatprep.subr.bf16.mxu0 0
      %2432 = vmatpush1.bf16.msra.mxu0 %v2409
      %2433 = vmatprep.subr.bf16.mxu0 0
      %2434 = vmatpush1.bf16.msra.mxu0 %v2410
      %2435 = vmatprep.subr.bf16.mxu0 0
      %2436 = vmatpush1.bf16.msra.mxu0 0
      %2437 = vmatprep.subr.bf16.mxu0 0
      %2438 = vmatpush1.bf16.msra.mxu0 0
      %2439 = vmatprep.subr.bf16.mxu0 0
      %2440 = vmatpush1.bf16.msra.mxu0 0
      %2441 = vmatprep.subr.bf16.mxu0 0
      %2442 = vmatpush1.bf16.msra.mxu0 0
      %2443 = vmatprep.subr.bf16.mxu0 0
      %2444 = vmatpush1.bf16.msra.mxu0 0
      %2445 = vmatprep.subr.bf16.mxu0 0
      %2446 = vmatpush1.bf16.msra.mxu0 0
      %2447 = vmatprep.subr.bf16.mxu0 0
      %2448 = vmatpush1.bf16.msra.mxu0 0
      %2449 = vmatprep.subr.bf16.mxu0 0
      %2450 = vmatpush1.bf16.msra.mxu0 0
      %2451 = vmatprep.mubr.bf16.mxu0 0
      %2452 = vmatmul.mubr.bf16.gmra.mrb[0].mxu0 %v1889
      %v2453 = vpop.f32.mrb[0].mxu0
      %v2454 = vadd.f32 0.0, %v2453
      %v2455 = vpop.f32.mrb[0].mxu0
      %v2456 = vpop.f32.mrb[0].mxu0
      %v2457 = vadd.f32 0.0, %v2456
      %v2458 = vpop.f32.mrb[0].mxu0
      %2459 = vmatprep.mubr.bf16.mxu0 0
      %2460 = vmatmul.mubr.bf16.gmra.mrb[0].mxu0 %v1890
      %v2461 = vpop.f32.mrb[0].mxu0
      %v2462 = vadd.f32 0.0, %v2461
      %v2463 = vpop.f32.mrb[0].mxu0
      %v2464 = vpop.f32.mrb[0].mxu0
      %v2465 = vadd.f32 0.0, %v2464
      %v2466 = vpop.f32.mrb[0].mxu0
      %2467 = vmatprep.mubr.bf16.mxu0 0
      %2468 = vmatmul.mubr.bf16.gmra.mrb[0].mxu0 %v1891
      %v2469 = vpop.f32.mrb[0].mxu0
      %v2470 = vadd.f32 0.0, %v2469
      %v2471 = vpop.f32.mrb[0].mxu0
      %v2472 = vpop.f32.mrb[0].mxu0
      %v2473 = vadd.f32 0.0, %v2472
      %v2474 = vpop.f32.mrb[0].mxu0
      %2475 = vmatprep.mubr.bf16.mxu0 0
      %2476 = vmatmul.mubr.bf16.gmra.mrb[0].mxu0 %v1892
      %v2477 = vpop.f32.mrb[0].mxu0
      %v2478 = vadd.f32 0.0, %v2477
      %v2479 = vpop.f32.mrb[0].mxu0
      %v2480 = vpop.f32.mrb[0].mxu0
      %v2481 = vadd.f32 0.0, %v2480
      %v2482 = vpop.f32.mrb[0].mxu0
      %2483 = vmatprep.mubr.bf16.mxu0 0
      %2484 = vmatmul.mubr.bf16.gmra.mrb[0].mxu0 %v1893
      %v2485 = vpop.f32.mrb[0].mxu0
      %v2486 = vadd.f32 0.0, %v2485
      %v2487 = vpop.f32.mrb[0].mxu0
      %v2488 = vpop.f32.mrb[0].mxu0
      %v2489 = vadd.f32 0.0, %v2488
      %v2490 = vpop.f32.mrb[0].mxu0
      %2491 = vmatprep.mubr.bf16.mxu0 0
      %2492 = vmatmul.mubr.bf16.gmra.mrb[0].mxu0 %v1894
      %v2493 = vpop.f32.mrb[0].mxu0
      %v2494 = vadd.f32 0.0, %v2493
      %v2495 = vpop.f32.mrb[0].mxu0
      %v2496 = vpop.f32.mrb[0].mxu0
      %v2497 = vadd.f32 0.0, %v2496
      %v2498 = vpop.f32.mrb[0].mxu0
      %2499 = vmatprep.mubr.bf16.mxu0 0
      %2500 = vmatmul.mubr.bf16.gmra.mrb[0].mxu0 %v1895
      %v2501 = vpop.f32.mrb[0].mxu0
      %v2502 = vadd.f32 0.0, %v2501
      %v2503 = vpop.f32.mrb[0].mxu0
      %v2504 = vpop.f32.mrb[0].mxu0
      %v2505 = vadd.f32 0.0, %v2504
      %v2506 = vpop.f32.mrb[0].mxu0
      %2507 = vmatprep.mubr.bf16.mxu0 0
      %2508 = vmatmul.mubr.bf16.gmra.mrb[0].mxu0 %v1896
      %v2509 = vpop.f32.mrb[0].mxu0
      %v2510 = vadd.f32 0.0, %v2509
      %v2511 = vpop.f32.mrb[0].mxu0
      %v2512 = vpop.f32.mrb[0].mxu0
      %v2513 = vadd.f32 0.0, %v2512
      %v2514 = vpop.f32.mrb[0].mxu0
      %2515 = vmatprep.mubr.bf16.mxu0 0
      %2516 = vmatmul.mubr.bf16.gmra.mrb[0].mxu0 %v1897
      %v2517 = vpop.f32.mrb[0].mxu0
      %v2518 = vadd.f32 0.0, %v2517
      %v2519 = vpop.f32.mrb[0].mxu0
      %v2520 = vpop.f32.mrb[0].mxu0
      %v2521 = vadd.f32 0.0, %v2520
      %v2522 = vpop.f32.mrb[0].mxu0
      %2523 = vmatprep.mubr.bf16.mxu0 0
      %2524 = vmatmul.mubr.bf16.gmra.mrb[0].mxu0 %v1898
      %v2525 = vpop.f32.mrb[0].mxu0
      %v2526 = vadd.f32 0.0, %v2525
      %v2527 = vpop.f32.mrb[0].mxu0
      %v2528 = vpop.f32.mrb[0].mxu0
      %v2529 = vadd.f32 0.0, %v2528
      %v2530 = vpop.f32.mrb[0].mxu0
      %2531 = vmatprep.mubr.bf16.mxu0 0
      %2532 = vmatmul.mubr.bf16.gmra.mrb[0].mxu0 %v1899
      %v2533 = vpop.f32.mrb[0].mxu0
      %v2534 = vadd.f32 0.0, %v2533
      %v2535 = vpop.f32.mrb[0].mxu0
      %v2536 = vpop.f32.mrb[0].mxu0
      %v2537 = vadd.f32 0.0, %v2536
      %v2538 = vpop.f32.mrb[0].mxu0
      %2539 = vmatprep.mubr.bf16.mxu0 0
      %2540 = vmatmul.mubr.bf16.gmra.mrb[0].mxu0 %v1900
      %v2541 = vpop.f32.mrb[0].mxu0
      %v2542 = vadd.f32 0.0, %v2541
      %v2543 = vpop.f32.mrb[0].mxu0
      %v2544 = vpop.f32.mrb[0].mxu0
      %v2545 = vadd.f32 0.0, %v2544
      %v2546 = vpop.f32.mrb[0].mxu0
      %2547 = vmatprep.mubr.bf16.mxu0 0
      %2548 = vmatmul.mubr.bf16.gmra.mrb[0].mxu0 %v1901
      %v2549 = vpop.f32.mrb[0].mxu0
      %v2550 = vadd.f32 0.0, %v2549
      %v2551 = vpop.f32.mrb[0].mxu0
      %v2552 = vpop.f32.mrb[0].mxu0
      %v2553 = vadd.f32 0.0, %v2552
      %v2554 = vpop.f32.mrb[0].mxu0
      %2555 = vmatprep.mubr.bf16.mxu0 0
      %2556 = vmatmul.mubr.bf16.gmra.mrb[0].mxu0 %v1902
      %v2557 = vpop.f32.mrb[0].mxu0
      %v2558 = vadd.f32 0.0, %v2557
      %v2559 = vpop.f32.mrb[0].mxu0
      %v2560 = vpop.f32.mrb[0].mxu0
      %v2561 = vadd.f32 0.0, %v2560
      %v2562 = vpop.f32.mrb[0].mxu0
      %2563 = vmatprep.mubr.bf16.mxu0 0
      %2564 = vmatmul.mubr.bf16.gmra.mrb[0].mxu0 %v1903
      %v2565 = vpop.f32.mrb[0].mxu0
      %v2566 = vadd.f32 0.0, %v2565
      %v2567 = vpop.f32.mrb[0].mxu0
      %v2568 = vpop.f32.mrb[0].mxu0
      %v2569 = vadd.f32 0.0, %v2568
      %v2570 = vpop.f32.mrb[0].mxu0
      %2571 = vmatprep.mubr.bf16.mxu0 0
      %2572 = vmatmul.mubr.bf16.gmra.mrb[0].mxu0 %v1904
      %v2573 = vpop.f32.mrb[0].mxu0
      %v2574 = vadd.f32 0.0, %v2573
      %v2575 = vpop.f32.mrb[0].mxu0
      %v2576 = vpop.f32.mrb[0].mxu0
      %v2577 = vadd.f32 0.0, %v2576
      %v2578 = vpop.f32.mrb[0].mxu0
      %2579 = vdwg.mxu0
      %v2580 = vadd.f32 %v2229, %v2454
      %v2581 = vadd.f32 %v2232, %v2457
      %v2582 = vadd.f32 %v2237, %v2462
      %v2583 = vadd.f32 %v2240, %v2465
      %v2584 = vadd.f32 %v2245, %v2470
      %v2585 = vadd.f32 %v2248, %v2473
      %v2586 = vadd.f32 %v2253, %v2478
      %v2587 = vadd.f32 %v2256, %v2481
      %v2588 = vadd.f32 %v2261, %v2486
      %v2589 = vadd.f32 %v2264, %v2489
      %v2590 = vadd.f32 %v2269, %v2494
      %v2591 = vadd.f32 %v2272, %v2497
      %v2592 = vadd.f32 %v2277, %v2502
      %v2593 = vadd.f32 %v2280, %v2505
      %v2594 = vadd.f32 %v2285, %v2510
      %v2595 = vadd.f32 %v2288, %v2513
      %v2596 = vadd.f32 %v2293, %v2518
      %v2597 = vadd.f32 %v2296, %v2521
      %v2598 = vadd.f32 %v2301, %v2526
      %v2599 = vadd.f32 %v2304, %v2529
      %v2600 = vadd.f32 %v2309, %v2534
      %v2601 = vadd.f32 %v2312, %v2537
      %v2602 = vadd.f32 %v2317, %v2542
      %v2603 = vadd.f32 %v2320, %v2545
      %v2604 = vadd.f32 %v2325, %v2550
      %v2605 = vadd.f32 %v2328, %v2553
      %v2606 = vadd.f32 %v2333, %v2558
      %v2607 = vadd.f32 %v2336, %v2561
      %v2608 = vadd.f32 %v2341, %v2566
      %v2609 = vadd.f32 %v2344, %v2569
      %v2610 = vadd.f32 %v2349, %v2574
      %v2611 = vadd.f32 %v2352, %v2577
      %v2612 = vlaneseq
      %v2613 = vshrl.u32 %v2612, 7
      %v2614 = vsub.s32 0, %v2613
      %v2615 = vrot.slane %v356, %v2614
      %v2616 = vmul.f32 %v2580, %v2615
      %v2617 = vmul.f32 %v2581, %v2615
      %v2618 = vmul.f32 %v2582, %v2615
      %v2619 = vmul.f32 %v2583, %v2615
      %v2620 = vmul.f32 %v2584, %v2615
      %v2621 = vmul.f32 %v2585, %v2615
      %v2622 = vmul.f32 %v2586, %v2615
      %v2623 = vmul.f32 %v2587, %v2615
      %v2624 = vmul.f32 %v2588, %v2615
      %v2625 = vmul.f32 %v2589, %v2615
      %v2626 = vmul.f32 %v2590, %v2615
      %v2627 = vmul.f32 %v2591, %v2615
      %v2628 = vmul.f32 %v2592, %v2615
      %v2629 = vmul.f32 %v2593, %v2615
      %v2630 = vmul.f32 %v2594, %v2615
      %v2631 = vmul.f32 %v2595, %v2615
      %v2632 = vmul.f32 %v2596, %v2615
      %v2633 = vmul.f32 %v2597, %v2615
      %v2634 = vmul.f32 %v2598, %v2615
      %v2635 = vmul.f32 %v2599, %v2615
      %v2636 = vmul.f32 %v2600, %v2615
      %v2637 = vmul.f32 %v2601, %v2615
      %v2638 = vmul.f32 %v2602, %v2615
      %v2639 = vmul.f32 %v2603, %v2615
      %v2640 = vmul.f32 %v2604, %v2615
      %v2641 = vmul.f32 %v2605, %v2615
      %v2642 = vmul.f32 %v2606, %v2615
      %v2643 = vmul.f32 %v2607, %v2615
      %v2644 = vmul.f32 %v2608, %v2615
      %v2645 = vmul.f32 %v2609, %v2615
      %v2646 = vmul.f32 %v2610, %v2615
      %v2647 = vmul.f32 %v2611, %v2615
      %v2648 = vlaneseq
      %v2649 = vshrl.u32 %v2648, 7
      %v2650 = vsub.s32 0, %v2649
      %v2651 = vrot.slane %v357, %v2650
      %v2652 = vadd.f32 %v2616, %v2651
      %v2653 = vadd.f32 %v2617, %v2651
      %v2654 = vadd.f32 %v2618, %v2651
      %v2655 = vadd.f32 %v2619, %v2651
      %v2656 = vadd.f32 %v2620, %v2651
      %v2657 = vadd.f32 %v2621, %v2651
      %v2658 = vadd.f32 %v2622, %v2651
      %v2659 = vadd.f32 %v2623, %v2651
      %v2660 = vadd.f32 %v2624, %v2651
      %v2661 = vadd.f32 %v2625, %v2651
      %v2662 = vadd.f32 %v2626, %v2651
      %v2663 = vadd.f32 %v2627, %v2651
      %v2664 = vadd.f32 %v2628, %v2651
      %v2665 = vadd.f32 %v2629, %v2651
      %v2666 = vadd.f32 %v2630, %v2651
      %v2667 = vadd.f32 %v2631, %v2651
      %v2668 = vadd.f32 %v2632, %v2651
      %v2669 = vadd.f32 %v2633, %v2651
      %v2670 = vadd.f32 %v2634, %v2651
      %v2671 = vadd.f32 %v2635, %v2651
      %v2672 = vadd.f32 %v2636, %v2651
      %v2673 = vadd.f32 %v2637, %v2651
      %v2674 = vadd.f32 %v2638, %v2651
      %v2675 = vadd.f32 %v2639, %v2651
      %v2676 = vadd.f32 %v2640, %v2651
      %v2677 = vadd.f32 %v2641, %v2651
      %v2678 = vadd.f32 %v2642, %v2651
      %v2679 = vadd.f32 %v2643, %v2651
      %v2680 = vadd.f32 %v2644, %v2651
      %v2681 = vadd.f32 %v2645, %v2651
      %v2682 = vadd.f32 %v2646, %v2651
      %v2683 = vadd.f32 %v2647, %v2651
      %v2684 = vadd.f32 %v2652, %v258
      %v2685 = vadd.f32 %v2653, %v259
      %v2686 = vadd.f32 %v2654, %v260
      %v2687 = vadd.f32 %v2655, %v261
      %v2688 = vadd.f32 %v2656, %v262
      %v2689 = vadd.f32 %v2657, %v263
      %v2690 = vadd.f32 %v2658, %v264
      %v2691 = vadd.f32 %v2659, %v265
      %v2692 = vadd.f32 %v2660, %v266
      %v2693 = vadd.f32 %v2661, %v267
      %v2694 = vadd.f32 %v2662, %v268
      %v2695 = vadd.f32 %v2663, %v269
      %v2696 = vadd.f32 %v2664, %v270
      %v2697 = vadd.f32 %v2665, %v271
      %v2698 = vadd.f32 %v2666, %v272
      %v2699 = vadd.f32 %v2667, %v273
      %v2700 = vadd.f32 %v2668, %v274
      %v2701 = vadd.f32 %v2669, %v275
      %v2702 = vadd.f32 %v2670, %v276
      %v2703 = vadd.f32 %v2671, %v277
      %v2704 = vadd.f32 %v2672, %v278
      %v2705 = vadd.f32 %v2673, %v279
      %v2706 = vadd.f32 %v2674, %v280
      %v2707 = vadd.f32 %v2675, %v281
      %v2708 = vadd.f32 %v2676, %v282
      %v2709 = vadd.f32 %v2677, %v283
      %v2710 = vadd.f32 %v2678, %v284
      %v2711 = vadd.f32 %v2679, %v285
      %v2712 = vadd.f32 %v2680, %v286
      %v2713 = vadd.f32 %v2681, %v287
      %v2714 = vadd.f32 %v2682, %v288
      %v2715 = vadd.f32 %v2683, %v289
      %v2716 = vmax.f32 %v2684, 0.0
      %v2717 = vmax.f32 %v2685, 0.0
      %v2718 = vmax.f32 %v2686, 0.0
      %v2719 = vmax.f32 %v2687, 0.0
      %v2720 = vmax.f32 %v2688, 0.0
      %v2721 = vmax.f32 %v2689, 0.0
      %v2722 = vmax.f32 %v2690, 0.0
      %v2723 = vmax.f32 %v2691, 0.0
      %v2724 = vmax.f32 %v2692, 0.0
      %v2725 = vmax.f32 %v2693, 0.0
      %v2726 = vmax.f32 %v2694, 0.0
      %v2727 = vmax.f32 %v2695, 0.0
      %v2728 = vmax.f32 %v2696, 0.0
      %v2729 = vmax.f32 %v2697, 0.0
      %v2730 = vmax.f32 %v2698, 0.0
      %v2731 = vmax.f32 %v2699, 0.0
      %v2732 = vmax.f32 %v2700, 0.0
      %v2733 = vmax.f32 %v2701, 0.0
      %v2734 = vmax.f32 %v2702, 0.0
      %v2735 = vmax.f32 %v2703, 0.0
      %v2736 = vmax.f32 %v2704, 0.0
      %v2737 = vmax.f32 %v2705, 0.0
      %v2738 = vmax.f32 %v2706, 0.0
      %v2739 = vmax.f32 %v2707, 0.0
      %v2740 = vmax.f32 %v2708, 0.0
      %v2741 = vmax.f32 %v2709, 0.0
      %v2742 = vmax.f32 %v2710, 0.0
      %v2743 = vmax.f32 %v2711, 0.0
      %v2744 = vmax.f32 %v2712, 0.0
      %v2745 = vmax.f32 %v2713, 0.0
      %v2746 = vmax.f32 %v2714, 0.0
      %v2747 = vmax.f32 %v2715, 0.0
      %2748 = vst [vmem:[%s253] sm:$0xff] %v2716
      %2749 = vst [vmem:[%s253 + $0x8] sm:$0xff] %v2717
      %2750 = vst [vmem:[%s253 + $0x10] sm:$0xff] %v2718
      %2751 = vst [vmem:[%s253 + $0x18] sm:$0xff] %v2719
      %2752 = vst [vmem:[%s253 + $0x20] sm:$0xff] %v2720
      %2753 = vst [vmem:[%s253 + $0x28] sm:$0xff] %v2721
      %2754 = vst [vmem:[%s253 + $0x30] sm:$0xff] %v2722
      %2755 = vst [vmem:[%s253 + $0x38] sm:$0xff] %v2723
      %2756 = vst [vmem:[%s253 + $0x40] sm:$0xff] %v2724
      %2757 = vst [vmem:[%s253 + $0x48] sm:$0xff] %v2725
      %2758 = vst [vmem:[%s253 + $0x50] sm:$0xff] %v2726
      %2759 = vst [vmem:[%s253 + $0x58] sm:$0xff] %v2727
      %2760 = vst [vmem:[%s253 + $0x60] sm:$0xff] %v2728
      %2761 = vst [vmem:[%s253 + $0x68] sm:$0xff] %v2729
      %2762 = vst [vmem:[%s253 + $0x70] sm:$0xff] %v2730
      %2763 = vst [vmem:[%s253 + $0x78] sm:$0xff] %v2731
      %2764 = vst [vmem:[%s253 + $0x80] sm:$0xff] %v2732
      %2765 = vst [vmem:[%s253 + $0x88] sm:$0xff] %v2733
      %2766 = vst [vmem:[%s253 + $0x90] sm:$0xff] %v2734
      %2767 = vst [vmem:[%s253 + $0x98] sm:$0xff] %v2735
      %2768 = vst [vmem:[%s253 + $0xa0] sm:$0xff] %v2736
      %2769 = vst [vmem:[%s253 + $0xa8] sm:$0xff] %v2737
      %2770 = vst [vmem:[%s253 + $0xb0] sm:$0xff] %v2738
      %2771 = vst [vmem:[%s253 + $0xb8] sm:$0xff] %v2739
      %2772 = vst [vmem:[%s253 + $0xc0] sm:$0xff] %v2740
      %2773 = vst [vmem:[%s253 + $0xc8] sm:$0xff] %v2741
      %2774 = vst [vmem:[%s253 + $0xd0] sm:$0xff] %v2742
      %2775 = vst [vmem:[%s253 + $0xd8] sm:$0xff] %v2743
      %2776 = vst [vmem:[%s253 + $0xe0] sm:$0xff] %v2744
      %2777 = vst [vmem:[%s253 + $0xe8] sm:$0xff] %v2745
      %2778 = vst [vmem:[%s253 + $0xf0] sm:$0xff] %v2746
      %2779 = vst [vmem:[%s253 + $0xf8] sm:$0xff] %v2747
      %s2780 = smul.u32 32, %s17
      %p2781 = scmp.lt.s32.totalorder %s2780, 63
      %s2782 = scalar_select %p2781, %s2780, 63
      %s2783 = smul.addr %s2782, 8
      %s2784 = scalar_lea.vmem %s6, %s2783
      // Predicated region
      $region45: #{basic_block_pallas.1} parent=43 // pred_check
        %p2785 = pneg %p166
      $region46: #{basic_block_pallas.1} parent=43 // pred_check_branch
        %2787 = sbr.rel (%p2785) target = $region48
      $region47: #{basic_block_pallas.1} parent=43 // pred_region
        %s2788 = smul.u32 32, %s17
      $region48: #{basic_block_pallas.1} parent=43 // pred_fallthru
        _
    $region44: #{basic_block_pallas.1} parent=5 // pred_fallthru
      _
    %p2789 = scmp.le.s32.totalorder 2, %s12
    // Predicated region
    $region49: #{basic_block_pallas.1} parent=5 // pred_check
      %p2790 = pneg %p2789
    $region50: #{basic_block_pallas.1} parent=5 // pred_check_branch
      %2792 = sbr.rel (%p2790) target = $region52
    $region51: #{basic_block_pallas.1} parent=5 // pred_region
      %s2793 = ssub.s32 %s12, 2
      // Predicated region
      $region53: #{basic_block_pallas.1} parent=51 // pred_check
        %p2794 = pneg %p172
      $region54: #{basic_block_pallas.1} parent=51 // pred_check_branch
        %2796 = sbr.rel (%p2794) target = $region56
      $region55: #{basic_block_pallas.1} parent=51 // pred_region
        %s2797 = smul.u32 32, %s18
        %p2798 = scmp.lt.s32.totalorder %s2797, 63
        %s2799 = scalar_select %p2798, %s2797, 63
        %s2800 = smul.addr %s2799, 8
        %s2801 = scalar_lea.vmem %s6, %s2800
      $region56: #{basic_block_pallas.1} parent=51 // pred_fallthru
        _
    $region52: #{basic_block_pallas.1} parent=5 // pred_fallthru
      _
  $region6: #{basic_block_pallas.1} parent=0 // loop_footer
    %s16 = sadd.s32 1, %s12
  $region7: #{basic_block_pallas.1} parent=0 // loop_footer_branch
    %11 = sbr.rel target = $region3
  $region8: #{basic_block_pallas.1} parent=0 // loop_exit
    _

</llo_original>
